<compile_context>
chip_gen: v7x
topology: tpu7x:2x2x1
jax: 0.10.0
libtpu: 0.0.40
codegen_flags: <defaults>
</compile_context>

<pallas_src>
import jax
import jax.numpy as jnp
from jax.experimental import pallas as pl
from jax.experimental.pallas import tpu as pltpu


def _const_spec(shape):
    """Full-array block whose index_map ignores the batch grid index (weights)."""
    nd = len(shape)
    return pl.BlockSpec(shape, lambda b, _z=(0,) * nd: _z)


def _vmem_limit_bytes():
    """Per-generation VMEM budget (v5e/v6e: 128 MiB, v7x: 64 MiB) with headroom."""
    default_cap = 64 * 1024 * 1024
    try:
        cap = int(getattr(pltpu.get_tpu_info(), "vmem_capacity_bytes", default_cap))
    except Exception:
        cap = default_cap
    return int(min(0.75 * cap, 100 * 1024 * 1024))


# --------------------------- fused forward kernel ----------------------------
def combined_kernel(x_ref, adj_ref,
                    w0_ref, b0_ref, w1_ref, b1_ref,
                    wg1t_ref, wg1b_ref, bg1_ref, wg2_ref, bg2_ref,
                    wn1t_ref, wn1b_ref, bn1_ref, w2blk_ref, bn2_ref,
                    graph_logit_ref, node_logit_ref):
    f32 = jnp.float32
    bf16 = jnp.bfloat16

    x = x_ref[...]      # (N, D_in) bf16
    adj = adj_ref[...]  # (N, N)    bf16

    # --- GNN layer 1 (reassociated: adj @ (x @ W0), narrower O(N^2) contraction) ---
    xw0 = jnp.dot(x, w0_ref[...], preferred_element_type=f32)            # (N, Dh)
    agg0 = jnp.dot(adj, xw0.astype(bf16), preferred_element_type=f32)    # (N, Dh)
    h1 = jnp.maximum(agg0 + b0_ref[...], 0.0)                            # f32
    h1b = h1.astype(bf16)

    # --- GNN layer 2 ---
    agg1 = jnp.dot(adj, h1b, preferred_element_type=f32)                 # (N, Dh)
    h2 = jnp.maximum(
        jnp.dot(agg1.astype(bf16), w1_ref[...], preferred_element_type=f32)
        + b1_ref[...], 0.0)                                              # f32
    h2b = h2.astype(bf16)

    # --- graph embedding: mean over nodes of concat readout, kept split ---
    # NOTE: static N is the exact node count here (no padding); with padded/tiled
    # rows the true N must come from SMEM and phantom rows must be masked.
    inv_n = 1.0 / h1.shape[0]
    g1 = (jnp.sum(h1, axis=0, keepdims=True) * inv_n).astype(bf16)       # (1, Dh)
    g2 = (jnp.sum(h2, axis=0, keepdims=True) * inv_n).astype(bf16)       # (1, Dh)

    # --- graph classifier head: Linear -> ReLU -> Linear (split-weight matmuls) ---
    hg = jnp.maximum(
        jnp.dot(g1, wg1t_ref[...], preferred_element_type=f32)
        + jnp.dot(g2, wg1b_ref[...], preferred_element_type=f32)
        + bg1_ref[...], 0.0)                                             # (1, latent)
    graph_logit_ref[...] = (
        jnp.dot(hg.astype(bf16), wg2_ref[...], preferred_element_type=f32)
        + bg2_ref[...])                                                  # (1, C_pad) f32

    # --- node classifier heads: all C heads fused into lane-dense matmuls ---
    h_all = jnp.maximum(
        jnp.dot(h1b, wn1t_ref[...], preferred_element_type=f32)
        + jnp.dot(h2b, wn1b_ref[...], preferred_element_type=f32)
        + bn1_ref[...], 0.0)                                             # (N, C*latent)
    node_logit_ref[...] = (
        jnp.dot(h_all.astype(bf16), w2blk_ref[...], preferred_element_type=f32)
        + bn2_ref[...]).astype(node_logit_ref.dtype)                     # (N, C_pad) bf16


# ------------------------------- wrappers -------------------------------------
def combined_classifier_forward_batched(x, adj, params):
    """x: (B, N, D_in) f32, adj: (B, N, N) f32 row-normalized dense adjacency."""
    B, N, D_in = x.shape
    Dh = params["gnn_w0"].shape[1]
    latent = 2 * Dh
    C = params["wn1"].shape[0]
    C_pad = int(pl.cdiv(C, 128) * 128)                    # lane-dense output width
    f32, bf16 = jnp.float32, jnp.bfloat16

    # ---- host-side one-time prep: bf16 operands (f32 biases), restructured heads ----
    x_bf = x.astype(bf16)
    adj_bf = adj.astype(bf16)
    w0 = params["gnn_w0"].astype(bf16)
    w1 = params["gnn_w1"].astype(bf16)
    b0 = params["gnn_b0"].astype(f32)
    b1 = params["gnn_b1"].astype(f32)

    # Graph head first layer split into the h1 / h2 halves of the concat readout.
    wg1t = params["wg1"][:Dh, :].astype(bf16)             # (Dh, latent)
    wg1b = params["wg1"][Dh:, :].astype(bf16)             # (Dh, latent)
    bg1 = params["bg1"].astype(f32)
    wg2_pad = jnp.pad(params["wg2"], ((0, 0), (0, C_pad - C))).astype(bf16)
    bg2_pad = jnp.pad(params["bg2"], ((0, 0), (0, C_pad - C))).astype(f32)

    # Node heads: stack per-class first layers along output axis -> (latent, C*latent)
    wn1_all = jnp.transpose(params["wn1"], (1, 0, 2)).reshape(latent, C * latent)
    wn1t = wn1_all[:Dh, :].astype(bf16)                   # (Dh, C*latent)
    wn1b = wn1_all[Dh:, :].astype(bf16)                   # (Dh, C*latent)
    bn1_all = params["bn1"].reshape(1, C * latent).astype(f32)
    # Per-class second layers as a block-diagonal (C*latent, C_pad) matrix.
    # Guard: optimal while C*latent <= 256 (here 128); larger C should switch to a
    # reshape + lane-reduce or tile the block diagonal into <=256-column panels.
    w2_flat = params["wn2"].reshape(C, latent)            # (C, latent)
    eye_c = jnp.eye(C, C_pad, dtype=f32)                  # (C, C_pad)
    w2_blk = (w2_flat[:, :, None] * eye_c[:, None, :]).reshape(
        C * latent, C_pad).astype(bf16)
    bn2_pad = jnp.pad(params["bn2"].reshape(1, C), ((0, 0), (0, C_pad - C))).astype(f32)

    inputs = (x_bf, adj_bf, w0, b0, w1, b1,
              wg1t, wg1b, bg1, wg2_pad, bg2_pad,
              wn1t, wn1b, bn1_all, w2_blk, bn2_pad)

    # Per-graph blocks (batch dim squeezed); weights use constant index_maps so the
    # pipeline keeps them resident across the batch grid.
    in_specs = [
        pl.BlockSpec((None, N, D_in), lambda b: (b, 0, 0)),
        pl.BlockSpec((None, N, N), lambda b: (b, 0, 0)),
    ] + [_const_spec(a.shape) for a in inputs[2:]]

    out_specs = (
        pl.BlockSpec((None, 1, C_pad), lambda b: (b, 0, 0)),
        pl.BlockSpec((None, N, C_pad), lambda b: (b, 0, 0)),
    )
    out_shape = (jax.ShapeDtypeStruct((B, 1, C_pad), f32),
                 jax.ShapeDtypeStruct((B, N, C_pad), bf16))

    graph_logit_pad, node_logit_pad = pl.pallas_call(
        combined_kernel,
        out_shape=out_shape,
        grid=(B,),
        in_specs=in_specs,
        out_specs=out_specs,
        compiler_params=pltpu.CompilerParams(
            dimension_semantics=("parallel",),       # graphs are independent -> megacore
            vmem_limit_bytes=_vmem_limit_bytes()),
    )(*inputs)

    graph_logit = graph_logit_pad[:, 0, :C]                        # (B, C) f32
    node_logit = node_logit_pad[:, :, :C].astype(f32)              # (B, N, C)
    return graph_logit, node_logit


def combined_classifier_forward(x, adj, params):
    """Single-graph convenience wrapper matching the PyTorch module's shapes."""
    g, n = combined_classifier_forward_batched(x[None], adj[None], params)
    return g[0:1], n[0]                                            # (1, C), (N, C)


# ------------------------- pure-JAX reference (checking) ---------------------
def reference_forward(x, adj, params):
    agg0 = adj @ x
    h1 = jax.nn.relu(agg0 @ params["gnn_w0"] + params["gnn_b0"])
    agg1 = adj @ h1
    h2 = jax.nn.relu(agg1 @ params["gnn_w1"] + params["gnn_b1"])
    node_emb = jnp.concatenate([h1, h2], axis=-1)
    graph_emb = jnp.mean(node_emb, axis=0, keepdims=True)
    hg = jax.nn.relu(graph_emb @ params["wg1"] + params["bg1"])
    graph_logit = hg @ params["wg2"] + params["bg2"]
    cols = []
    for c in range(params["wn1"].shape[0]):
        h = jax.nn.relu(node_emb @ params["wn1"][c] + params["bn1"][c])
        cols.append(h @ params["wn2"][c] + params["bn2"][c])
    node_logit = jnp.concatenate(cols, axis=-1)
    return graph_logit, node_logit


# ------------------------------ param setup -----------------------------------
def init_params(key, d_in, d_hidden, nr_classes):
    latent = 2 * d_hidden
    ks = jax.random.split(key, 12)
    scale = 0.1
    return {
        # GNN layers
        "gnn_w0": scale * jax.random.normal(ks[0], (d_in, d_hidden), jnp.float32),
        "gnn_b0": scale * jax.random.normal(ks[1], (1, d_hidden), jnp.float32),
        "gnn_w1": scale * jax.random.normal(ks[2], (d_hidden, d_hidden), jnp.float32),
        "gnn_b1": scale * jax.random.normal(ks[3], (1, d_hidden), jnp.float32),
        # Graph classifier head (n_layers=2, hidden_dim=latent)
        "wg1": scale * jax.random.normal(ks[4], (latent, latent), jnp.float32),
        "bg1": scale * jax.random.normal(ks[5], (1, latent), jnp.float32),
        "wg2": scale * jax.random.normal(ks[6], (latent, nr_classes), jnp.float32),
        "bg2": scale * jax.random.normal(ks[7], (1, nr_classes), jnp.float32),
        # Node classifier heads (seperate_heads=True): stacked per-class weights
        "wn1": scale * jax.random.normal(ks[8], (nr_classes, latent, latent), jnp.float32),
        "bn1": scale * jax.random.normal(ks[9], (nr_classes, 1, latent), jnp.float32),
        "wn2": scale * jax.random.normal(ks[10], (nr_classes, latent, 1), jnp.float32),
        "bn2": scale * jax.random.normal(ks[11], (nr_classes, 1, 1), jnp.float32),
    }


if __name__ == "__main__":
    key = jax.random.PRNGKey(0)
    B = 4              # graphs batched per pallas_call (leading "parallel" grid axis)
    N_NODES = 8        # nodes per graph
    D_IN = 16          # input node feature dim
    D_HIDDEN = 16      # gnn output_dim per layer
    NR_CLASSES = 4     # latent = 2 * D_HIDDEN = 32 (concat readout, num_layers=2)

    k_x, k_a, k_p = jax.random.split(key, 3)
    x = jax.random.normal(k_x, (B, N_NODES, D_IN), jnp.float32)

    # deterministic per-graph adjacency: ring + self loops + random symmetric extras,
    # row-normalized
    idx = jnp.arange(N_NODES)
    ring = (jnp.eye(N_NODES, dtype=jnp.float32)
            + jnp.eye(N_NODES, dtype=jnp.float32)[(idx + 1) % N_NODES]
            + jnp.eye(N_NODES, dtype=jnp.float32)[(idx - 1) % N_NODES])
    extra = (jax.random.uniform(k_a, (B, N_NODES, N_NODES)) < 0.2).astype(jnp.float32)
    extra = jnp.maximum(extra, jnp.transpose(extra, (0, 2, 1)))
    adj = jnp.minimum(ring[None] + extra, 1.0)
    adj = adj / jnp.sum(adj, axis=-1, keepdims=True)

    params = init_params(k_p, D_IN, D_HIDDEN, NR_CLASSES)

    graph_logit, node_logit = combined_classifier_forward_batched(x, adj, params)
    jax.block_until_ready((graph_logit, node_logit))

    assert graph_logit.shape == (B, NR_CLASSES)
    assert node_logit.shape == (B, N_NODES, NR_CLASSES)

    # Relaxed tolerance: kernel uses bf16 MXU operands (f32 accumulation) and a
    # reassociated layer-1 matmul; reference is pure f32.
    for b in range(B):
        ref_g, ref_n = reference_forward(x[b], adj[b], params)
        assert jnp.allclose(graph_logit[b:b + 1], ref_g, rtol=5e-2, atol=3e-2), b
        assert jnp.allclose(node_logit[b], ref_n, rtol=5e-2, atol=3e-2), b

    print("KERNEL_OK")
</pallas_src>

<mosaic_0001>
module attributes {stable_mosaic.version = 11 : i64} {
  func.func @combined_kernel(%arg0: i32, %arg1: memref<1x8x16xbf16, #tpu.memory_space<vmem>>, %arg2: memref<1x8x8xbf16, #tpu.memory_space<vmem>>, %arg3: memref<16x16xbf16, #tpu.memory_space<vmem>>, %arg4: memref<1x16xf32, #tpu.memory_space<vmem>>, %arg5: memref<16x16xbf16, #tpu.memory_space<vmem>>, %arg6: memref<1x16xf32, #tpu.memory_space<vmem>>, %arg7: memref<16x32xbf16, #tpu.memory_space<vmem>>, %arg8: memref<16x32xbf16, #tpu.memory_space<vmem>>, %arg9: memref<1x32xf32, #tpu.memory_space<vmem>>, %arg10: memref<32x128xbf16, #tpu.memory_space<vmem>>, %arg11: memref<1x128xf32, #tpu.memory_space<vmem>>, %arg12: memref<16x128xbf16, #tpu.memory_space<vmem>>, %arg13: memref<16x128xbf16, #tpu.memory_space<vmem>>, %arg14: memref<1x128xf32, #tpu.memory_space<vmem>>, %arg15: memref<128x128xbf16, #tpu.memory_space<vmem>>, %arg16: memref<1x128xf32, #tpu.memory_space<vmem>>, %arg17: memref<1x1x128xf32, #tpu.memory_space<vmem>>, %arg18: memref<1x8x128xbf16, #tpu.memory_space<vmem>>) attributes {dimension_semantics = [#tpu.dimension_semantics<parallel>], iteration_bounds = array<i64: 4>, scalar_prefetch = 0 : i64, scratch_operands = 0 : i64, tpu.core_type = #tpu.core_type<tc>, window_params = [{transform_indices = @transform_0, window_bounds = array<i64: 1, 8, 16>}, {transform_indices = @transform_1, window_bounds = array<i64: 1, 8, 8>}, {pipeline_mode = #tpu.pipeline_mode<synchronous>, transform_indices = @transform_2, window_bounds = array<i64: 16, 16>}, {pipeline_mode = #tpu.pipeline_mode<synchronous>, transform_indices = @transform_3, window_bounds = array<i64: 1, 16>}, {pipeline_mode = #tpu.pipeline_mode<synchronous>, transform_indices = @transform_4, window_bounds = array<i64: 16, 16>}, {pipeline_mode = #tpu.pipeline_mode<synchronous>, transform_indices = @transform_5, window_bounds = array<i64: 1, 16>}, {pipeline_mode = #tpu.pipeline_mode<synchronous>, transform_indices = @transform_6, window_bounds = array<i64: 16, 32>}, {pipeline_mode = #tpu.pipeline_mode<synchronous>, transform_indices = @transform_7, window_bounds = array<i64: 16, 32>}, {pipeline_mode = #tpu.pipeline_mode<synchronous>, transform_indices = @transform_8, window_bounds = array<i64: 1, 32>}, {pipeline_mode = #tpu.pipeline_mode<synchronous>, transform_indices = @transform_9, window_bounds = array<i64: 32, 128>}, {pipeline_mode = #tpu.pipeline_mode<synchronous>, transform_indices = @transform_10, window_bounds = array<i64: 1, 128>}, {pipeline_mode = #tpu.pipeline_mode<synchronous>, transform_indices = @transform_11, window_bounds = array<i64: 16, 128>}, {pipeline_mode = #tpu.pipeline_mode<synchronous>, transform_indices = @transform_12, window_bounds = array<i64: 16, 128>}, {pipeline_mode = #tpu.pipeline_mode<synchronous>, transform_indices = @transform_13, window_bounds = array<i64: 1, 128>}, {pipeline_mode = #tpu.pipeline_mode<synchronous>, transform_indices = @transform_14, window_bounds = array<i64: 128, 128>}, {pipeline_mode = #tpu.pipeline_mode<synchronous>, transform_indices = @transform_15, window_bounds = array<i64: 1, 128>}, {transform_indices = @transform_16, window_bounds = array<i64: 1, 1, 128>}, {transform_indices = @transform_17, window_bounds = array<i64: 1, 8, 128>}]} {
    %c0 = arith.constant 0 : index
    %c0_0 = arith.constant 0 : index
    %c0_1 = arith.constant 0 : index
    %0 = vector.load %arg1[%c0, %c0_0, %c0_1] : memref<1x8x16xbf16, #tpu.memory_space<vmem>>, vector<1x8x16xbf16>
    %1 = vector.shape_cast %0 : vector<1x8x16xbf16> to vector<8x16xbf16>
    %c0_2 = arith.constant 0 : index
    %c0_3 = arith.constant 0 : index
    %c0_4 = arith.constant 0 : index
    %2 = vector.load %arg2[%c0_2, %c0_3, %c0_4] : memref<1x8x8xbf16, #tpu.memory_space<vmem>>, vector<1x8x8xbf16>
    %3 = vector.shape_cast %2 : vector<1x8x8xbf16> to vector<8x8xbf16>
    %c0_5 = arith.constant 0 : index
    %c0_6 = arith.constant 0 : index
    %4 = vector.load %arg3[%c0_5, %c0_6] : memref<16x16xbf16, #tpu.memory_space<vmem>>, vector<16x16xbf16>
    %cst = arith.constant dense<0.000000e+00> : vector<8x16xf32>
    %5 = tpu.matmul %1, %4, %cst {dimension_numbers = #tpu.dot_dimension_numbers<[1], [0], [0], [1], [0, 0, 1, 1], [], []>} : vector<8x16xbf16>, vector<16x16xbf16>, vector<8x16xf32> -> vector<8x16xf32>
    %6 = arith.truncf %5 : vector<8x16xf32> to vector<8x16xbf16>
    %cst_7 = arith.constant dense<0.000000e+00> : vector<8x16xf32>
    %7 = tpu.matmul %3, %6, %cst_7 {dimension_numbers = #tpu.dot_dimension_numbers<[1], [0], [0], [1], [0, 0, 1, 1], [], []>} : vector<8x8xbf16>, vector<8x16xbf16>, vector<8x16xf32> -> vector<8x16xf32>
    %c0_8 = arith.constant 0 : index
    %c0_9 = arith.constant 0 : index
    %8 = vector.load %arg4[%c0_8, %c0_9] : memref<1x16xf32, #tpu.memory_space<vmem>>, vector<1x16xf32>
    %9 = vector.broadcast %8 : vector<1x16xf32> to vector<8x16xf32>
    %10 = arith.addf %7, %9 : vector<8x16xf32>
    %cst_10 = arith.constant 0.000000e+00 : f32
    %11 = vector.broadcast %cst_10 : f32 to vector<8x16xf32>
    %12 = arith.maximumf %10, %11 : vector<8x16xf32>
    %13 = arith.truncf %12 : vector<8x16xf32> to vector<8x16xbf16>
    %cst_11 = arith.constant dense<0.000000e+00> : vector<8x16xf32>
    %14 = tpu.matmul %3, %13, %cst_11 {dimension_numbers = #tpu.dot_dimension_numbers<[1], [0], [0], [1], [0, 0, 1, 1], [], []>} : vector<8x8xbf16>, vector<8x16xbf16>, vector<8x16xf32> -> vector<8x16xf32>
    %15 = arith.truncf %14 : vector<8x16xf32> to vector<8x16xbf16>
    %c0_12 = arith.constant 0 : index
    %c0_13 = arith.constant 0 : index
    %16 = vector.load %arg5[%c0_12, %c0_13] : memref<16x16xbf16, #tpu.memory_space<vmem>>, vector<16x16xbf16>
    %cst_14 = arith.constant dense<0.000000e+00> : vector<8x16xf32>
    %17 = tpu.matmul %15, %16, %cst_14 {dimension_numbers = #tpu.dot_dimension_numbers<[1], [0], [0], [1], [0, 0, 1, 1], [], []>} : vector<8x16xbf16>, vector<16x16xbf16>, vector<8x16xf32> -> vector<8x16xf32>
    %c0_15 = arith.constant 0 : index
    %c0_16 = arith.constant 0 : index
    %18 = vector.load %arg6[%c0_15, %c0_16] : memref<1x16xf32, #tpu.memory_space<vmem>>, vector<1x16xf32>
    %19 = vector.broadcast %18 : vector<1x16xf32> to vector<8x16xf32>
    %20 = arith.addf %17, %19 : vector<8x16xf32>
    %cst_17 = arith.constant 0.000000e+00 : f32
    %21 = vector.broadcast %cst_17 : f32 to vector<8x16xf32>
    %22 = arith.maximumf %20, %21 : vector<8x16xf32>
    %23 = arith.truncf %22 : vector<8x16xf32> to vector<8x16xbf16>
    %cst_18 = arith.constant dense<0.000000e+00> : vector<16xf32>
    %24 = vector.multi_reduction <add>, %12, %cst_18 [0] : vector<8x16xf32> to vector<16xf32>
    %25 = vector.shape_cast %24 : vector<16xf32> to vector<1x16xf32>
    %cst_19 = arith.constant 1.250000e-01 : f32
    %26 = vector.broadcast %cst_19 : f32 to vector<1x16xf32>
    %27 = arith.mulf %25, %26 : vector<1x16xf32>
    %28 = arith.truncf %27 : vector<1x16xf32> to vector<1x16xbf16>
    %cst_20 = arith.constant dense<0.000000e+00> : vector<16xf32>
    %29 = vector.multi_reduction <add>, %22, %cst_20 [0] : vector<8x16xf32> to vector<16xf32>
    %30 = vector.shape_cast %29 : vector<16xf32> to vector<1x16xf32>
    %cst_21 = arith.constant 1.250000e-01 : f32
    %31 = vector.broadcast %cst_21 : f32 to vector<1x16xf32>
    %32 = arith.mulf %30, %31 : vector<1x16xf32>
    %33 = arith.truncf %32 : vector<1x16xf32> to vector<1x16xbf16>
    %c0_22 = arith.constant 0 : index
    %c0_23 = arith.constant 0 : index
    %34 = vector.load %arg7[%c0_22, %c0_23] : memref<16x32xbf16, #tpu.memory_space<vmem>>, vector<16x32xbf16>
    %cst_24 = arith.constant dense<0.000000e+00> : vector<1x32xf32>
    %35 = tpu.matmul %28, %34, %cst_24 {dimension_numbers = #tpu.dot_dimension_numbers<[1], [0], [0], [1], [0, 0, 1, 1], [], []>} : vector<1x16xbf16>, vector<16x32xbf16>, vector<1x32xf32> -> vector<1x32xf32>
    %c0_25 = arith.constant 0 : index
    %c0_26 = arith.constant 0 : index
    %36 = vector.load %arg8[%c0_25, %c0_26] : memref<16x32xbf16, #tpu.memory_space<vmem>>, vector<16x32xbf16>
    %cst_27 = arith.constant dense<0.000000e+00> : vector<1x32xf32>
    %37 = tpu.matmul %33, %36, %cst_27 {dimension_numbers = #tpu.dot_dimension_numbers<[1], [0], [0], [1], [0, 0, 1, 1], [], []>} : vector<1x16xbf16>, vector<16x32xbf16>, vector<1x32xf32> -> vector<1x32xf32>
    %38 = arith.addf %35, %37 : vector<1x32xf32>
    %c0_28 = arith.constant 0 : index
    %c0_29 = arith.constant 0 : index
    %39 = vector.load %arg9[%c0_28, %c0_29] : memref<1x32xf32, #tpu.memory_space<vmem>>, vector<1x32xf32>
    %40 = arith.addf %38, %39 : vector<1x32xf32>
    %cst_30 = arith.constant 0.000000e+00 : f32
    %41 = vector.broadcast %cst_30 : f32 to vector<1x32xf32>
    %42 = arith.maximumf %40, %41 : vector<1x32xf32>
    %43 = arith.truncf %42 : vector<1x32xf32> to vector<1x32xbf16>
    %c0_31 = arith.constant 0 : index
    %c0_32 = arith.constant 0 : index
    %44 = vector.load %arg10[%c0_31, %c0_32] : memref<32x128xbf16, #tpu.memory_space<vmem>>, vector<32x128xbf16>
    %cst_33 = arith.constant dense<0.000000e+00> : vector<1x128xf32>
    %45 = tpu.matmul %43, %44, %cst_33 {dimension_numbers = #tpu.dot_dimension_numbers<[1], [0], [0], [1], [0, 0, 1, 1], [], []>} : vector<1x32xbf16>, vector<32x128xbf16>, vector<1x128xf32> -> vector<1x128xf32>
    %c0_34 = arith.constant 0 : index
    %c0_35 = arith.constant 0 : index
    %46 = vector.load %arg11[%c0_34, %c0_35] : memref<1x128xf32, #tpu.memory_space<vmem>>, vector<1x128xf32>
    %47 = arith.addf %45, %46 : vector<1x128xf32>
    %c0_36 = arith.constant 0 : index
    %c0_37 = arith.constant 0 : index
    %c0_38 = arith.constant 0 : index
    %48 = vector.load %arg17[%c0_36, %c0_37, %c0_38] : memref<1x1x128xf32, #tpu.memory_space<vmem>>, vector<1x1x128xf32>
    %49 = vector.shape_cast %48 : vector<1x1x128xf32> to vector<1x128xf32>
    %50 = vector.shape_cast %47 : vector<1x128xf32> to vector<1x1x128xf32>
    tpu.vector_store %arg17[%c0_36, %c0_37, %c0_38], %50 {strides = array<i32>} : memref<1x1x128xf32, #tpu.memory_space<vmem>>, vector<1x1x128xf32>,
    %c0_39 = arith.constant 0 : index
    %c0_40 = arith.constant 0 : index
    %51 = vector.load %arg12[%c0_39, %c0_40] : memref<16x128xbf16, #tpu.memory_space<vmem>>, vector<16x128xbf16>
    %cst_41 = arith.constant dense<0.000000e+00> : vector<8x128xf32>
    %52 = tpu.matmul %13, %51, %cst_41 {dimension_numbers = #tpu.dot_dimension_numbers<[1], [0], [0], [1], [0, 0, 1, 1], [], []>} : vector<8x16xbf16>, vector<16x128xbf16>, vector<8x128xf32> -> vector<8x128xf32>
    %c0_42 = arith.constant 0 : index
    %c0_43 = arith.constant 0 : index
    %53 = vector.load %arg13[%c0_42, %c0_43] : memref<16x128xbf16, #tpu.memory_space<vmem>>, vector<16x128xbf16>
    %cst_44 = arith.constant dense<0.000000e+00> : vector<8x128xf32>
    %54 = tpu.matmul %23, %53, %cst_44 {dimension_numbers = #tpu.dot_dimension_numbers<[1], [0], [0], [1], [0, 0, 1, 1], [], []>} : vector<8x16xbf16>, vector<16x128xbf16>, vector<8x128xf32> -> vector<8x128xf32>
    %55 = arith.addf %52, %54 : vector<8x128xf32>
    %c0_45 = arith.constant 0 : index
    %c0_46 = arith.constant 0 : index
    %56 = vector.load %arg14[%c0_45, %c0_46] : memref<1x128xf32, #tpu.memory_space<vmem>>, vector<1x128xf32>
    %57 = vector.broadcast %56 : vector<1x128xf32> to vector<8x128xf32>
    %58 = arith.addf %55, %57 : vector<8x128xf32>
    %cst_47 = arith.constant 0.000000e+00 : f32
    %59 = vector.broadcast %cst_47 : f32 to vector<8x128xf32>
    %60 = arith.maximumf %58, %59 : vector<8x128xf32>
    %61 = arith.truncf %60 : vector<8x128xf32> to vector<8x128xbf16>
    %c0_48 = arith.constant 0 : index
    %c0_49 = arith.constant 0 : index
    %62 = vector.load %arg15[%c0_48, %c0_49] : memref<128x128xbf16, #tpu.memory_space<vmem>>, vector<128x128xbf16>
    %cst_50 = arith.constant dense<0.000000e+00> : vector<8x128xf32>
    %63 = tpu.matmul %61, %62, %cst_50 {dimension_numbers = #tpu.dot_dimension_numbers<[1], [0], [0], [1], [0, 0, 1, 1], [], []>} : vector<8x128xbf16>, vector<128x128xbf16>, vector<8x128xf32> -> vector<8x128xf32>
    %c0_51 = arith.constant 0 : index
    %c0_52 = arith.constant 0 : index
    %64 = vector.load %arg16[%c0_51, %c0_52] : memref<1x128xf32, #tpu.memory_space<vmem>>, vector<1x128xf32>
    %65 = vector.broadcast %64 : vector<1x128xf32> to vector<8x128xf32>
    %66 = arith.addf %63, %65 : vector<8x128xf32>
    %67 = arith.truncf %66 : vector<8x128xf32> to vector<8x128xbf16>
    %c0_53 = arith.constant 0 : index
    %c0_54 = arith.constant 0 : index
    %c0_55 = arith.constant 0 : index
    %68 = vector.load %arg18[%c0_53, %c0_54, %c0_55] : memref<1x8x128xbf16, #tpu.memory_space<vmem>>, vector<1x8x128xbf16>
    %69 = vector.shape_cast %68 : vector<1x8x128xbf16> to vector<8x128xbf16>
    %70 = vector.shape_cast %67 : vector<8x128xbf16> to vector<1x8x128xbf16>
    tpu.vector_store %arg18[%c0_53, %c0_54, %c0_55], %70 {strides = array<i32>} : memref<1x8x128xbf16, #tpu.memory_space<vmem>>, vector<1x8x128xbf16>,
    return
  }
  func.func @transform_0(%arg0: i32) -> (i32, i32, i32) {
    %c0_i32 = arith.constant 0 : i32
    %c0_i32_0 = arith.constant 0 : i32
    %c0_i32_1 = arith.constant 0 : i32
    return %arg0, %c0_i32, %c0_i32_0 : i32, i32, i32
  }
  func.func @transform_1(%arg0: i32) -> (i32, i32, i32) {
    %c0_i32 = arith.constant 0 : i32
    %c0_i32_0 = arith.constant 0 : i32
    %c0_i32_1 = arith.constant 0 : i32
    return %arg0, %c0_i32, %c0_i32_0 : i32, i32, i32
  }
  func.func @transform_2(%arg0: i32) -> (i32, i32) {
    %c0_i32 = arith.constant 0 : i32
    %c0_i32_0 = arith.constant 0 : i32
    %c0_i32_1 = arith.constant 0 : i32
    return %c0_i32, %c0_i32_0 : i32, i32
  }
  func.func @transform_3(%arg0: i32) -> (i32, i32) {
    %c0_i32 = arith.constant 0 : i32
    %c0_i32_0 = arith.constant 0 : i32
    %c0_i32_1 = arith.constant 0 : i32
    return %c0_i32, %c0_i32_0 : i32, i32
  }
  func.func @transform_4(%arg0: i32) -> (i32, i32) {
    %c0_i32 = arith.constant 0 : i32
    %c0_i32_0 = arith.constant 0 : i32
    %c0_i32_1 = arith.constant 0 : i32
    return %c0_i32, %c0_i32_0 : i32, i32
  }
  func.func @transform_5(%arg0: i32) -> (i32, i32) {
    %c0_i32 = arith.constant 0 : i32
    %c0_i32_0 = arith.constant 0 : i32
    %c0_i32_1 = arith.constant 0 : i32
    return %c0_i32, %c0_i32_0 : i32, i32
  }
  func.func @transform_6(%arg0: i32) -> (i32, i32) {
    %c0_i32 = arith.constant 0 : i32
    %c0_i32_0 = arith.constant 0 : i32
    %c0_i32_1 = arith.constant 0 : i32
    return %c0_i32, %c0_i32_0 : i32, i32
  }
  func.func @transform_7(%arg0: i32) -> (i32, i32) {
    %c0_i32 = arith.constant 0 : i32
    %c0_i32_0 = arith.constant 0 : i32
    %c0_i32_1 = arith.constant 0 : i32
    return %c0_i32, %c0_i32_0 : i32, i32
  }
  func.func @transform_8(%arg0: i32) -> (i32, i32) {
    %c0_i32 = arith.constant 0 : i32
    %c0_i32_0 = arith.constant 0 : i32
    %c0_i32_1 = arith.constant 0 : i32
    return %c0_i32, %c0_i32_0 : i32, i32
  }
  func.func @transform_9(%arg0: i32) -> (i32, i32) {
    %c0_i32 = arith.constant 0 : i32
    %c0_i32_0 = arith.constant 0 : i32
    %c0_i32_1 = arith.constant 0 : i32
    return %c0_i32, %c0_i32_0 : i32, i32
  }
  func.func @transform_10(%arg0: i32) -> (i32, i32) {
    %c0_i32 = arith.constant 0 : i32
    %c0_i32_0 = arith.constant 0 : i32
    %c0_i32_1 = arith.constant 0 : i32
    return %c0_i32, %c0_i32_0 : i32, i32
  }
  func.func @transform_11(%arg0: i32) -> (i32, i32) {
    %c0_i32 = arith.constant 0 : i32
    %c0_i32_0 = arith.constant 0 : i32
    %c0_i32_1 = arith.constant 0 : i32
    return %c0_i32, %c0_i32_0 : i32, i32
  }
  func.func @transform_12(%arg0: i32) -> (i32, i32) {
    %c0_i32 = arith.constant 0 : i32
    %c0_i32_0 = arith.constant 0 : i32
    %c0_i32_1 = arith.constant 0 : i32
    return %c0_i32, %c0_i32_0 : i32, i32
  }
  func.func @transform_13(%arg0: i32) -> (i32, i32) {
    %c0_i32 = arith.constant 0 : i32
    %c0_i32_0 = arith.constant 0 : i32
    %c0_i32_1 = arith.constant 0 : i32
    return %c0_i32, %c0_i32_0 : i32, i32
  }
  func.func @transform_14(%arg0: i32) -> (i32, i32) {
    %c0_i32 = arith.constant 0 : i32
    %c0_i32_0 = arith.constant 0 : i32
    %c0_i32_1 = arith.constant 0 : i32
    return %c0_i32, %c0_i32_0 : i32, i32
  }
  func.func @transform_15(%arg0: i32) -> (i32, i32) {
    %c0_i32 = arith.constant 0 : i32
    %c0_i32_0 = arith.constant 0 : i32
    %c0_i32_1 = arith.constant 0 : i32
    return %c0_i32, %c0_i32_0 : i32, i32
  }
  func.func @transform_16(%arg0: i32) -> (i32, i32, i32) {
    %c0_i32 = arith.constant 0 : i32
    %c0_i32_0 = arith.constant 0 : i32
    %c0_i32_1 = arith.constant 0 : i32
    return %arg0, %c0_i32, %c0_i32_0 : i32, i32, i32
  }
  func.func @transform_17(%arg0: i32) -> (i32, i32, i32) {
    %c0_i32 = arith.constant 0 : i32
    %c0_i32_0 = arith.constant 0 : i32
    %c0_i32_1 = arith.constant 0 : i32
    return %arg0, %c0_i32, %c0_i32_0 : i32, i32, i32
  }
}

</mosaic_0001>

<llo_original>
// kernel: tpu_custom_call.1
$region0: #{tpu_custom_call.1}
  #allocation0 [shape = 'u32[]', space=smem, size = 0x4, offset = 0x4, fixed_abs, tag = 'smem constant byte address 0x4 - core index']
  #allocation1 [shape = 'u32[144,128]{1,0:T(1,128)}', space=vmem, size = 0x12000, scoped, tag = 'internal scratch']
  %s0 = inlined_call_operand.hbm [shape: bf16[4,8,16], index: 0, kind: input, shape index: {}]
  %s1 = inlined_call_operand.hbm [shape: bf16[4,8,8], index: 1, kind: input, shape index: {}]
  %s2 = inlined_call_operand.hbm [shape: bf16[16,16], index: 2, kind: input, shape index: {}]
  %s3 = inlined_call_operand.vmem [shape: f32[1,16], index: 3, kind: input, shape index: {}]
  %s4 = inlined_call_operand.vmem [shape: bf16[16,16], index: 4, kind: input, shape index: {}]
  %s5 = inlined_call_operand.hbm [shape: f32[1,16], index: 5, kind: input, shape index: {}]
  %s6 = inlined_call_operand.hbm [shape: bf16[16,32], index: 6, kind: input, shape index: {}]
  %s7 = inlined_call_operand.hbm [shape: bf16[16,32], index: 7, kind: input, shape index: {}]
  %s8 = inlined_call_operand.hbm [shape: f32[1,32], index: 8, kind: input, shape index: {}]
  %s9 = inlined_call_operand.vmem [shape: bf16[32,128], index: 9, kind: input, shape index: {}]
  %s10 = inlined_call_operand.hbm [shape: f32[1,128], index: 10, kind: input, shape index: {}]
  %s11 = inlined_call_operand.vmem [shape: bf16[16,128], index: 11, kind: input, shape index: {}]
  %s12 = inlined_call_operand.vmem [shape: bf16[16,128], index: 12, kind: input, shape index: {}]
  %s13 = inlined_call_operand.vmem [shape: f32[1,128], index: 13, kind: input, shape index: {}]
  %s14 = inlined_call_operand.hbm [shape: bf16[128,128], index: 14, kind: input, shape index: {}]
  %s15 = inlined_call_operand.vmem [shape: f32[1,128], index: 15, kind: input, shape index: {}]
  %s16 = inlined_call_operand.hbm [shape: f32[4,1,128], index: 16, kind: output, shape index: {0}]
  %s17 = inlined_call_operand.hbm [shape: bf16[4,8,128], index: 17, kind: output, shape index: {1}]
  %18 = xla_tuple %s16, %s17
  %s19 = sld [smem:[#allocation0]]
  $region141: #{tpu_custom_call.1} parent=0
    _
  %s21 = ssub.s32 1, %s19
  %s22 = scalar_select 0, %s21, %s19
  $region1: #{tpu_custom_call.1} parent=0
    #allocation2 [shape = 'u8[4096]{0}', space=vmem, size = 0x1000, scoped, tag = 'input window, operand 0']
    #allocation3 [shape = 's32[2]{0}', space=sflag, size = 0x8, scoped, tag = 'scoped memory for tpu_custom_call.1']
    #allocation4 [shape = 's32[2]{0}', space=sflag, size = 0x8, scoped, tag = 'scoped memory for tpu_custom_call.1']
    #allocation5 [shape = 'u8[4096]{0}', space=vmem, size = 0x1000, scoped, tag = 'input window, operand 1']
    #allocation6 [shape = 's32[2]{0}', space=sflag, size = 0x8, scoped, tag = 'scoped memory for tpu_custom_call.1']
    #allocation7 [shape = 'u8[4096]{0}', space=vmem, size = 0x1000, scoped, tag = 'input window, operand 2, single buffered']
    #allocation8 [shape = 'u8[512]{0}', space=vmem, size = 0x400, scoped, tag = 'input window, operand 5, single buffered']
    #allocation9 [shape = 's32[1]{0}', space=sflag, size = 0x4, scoped, tag = 'scoped memory for tpu_custom_call.1']
    #allocation10 [shape = 'u8[4096]{0}', space=vmem, size = 0x1000, scoped, tag = 'input window, operand 6, single buffered']
    #allocation11 [shape = 'u8[4096]{0}', space=vmem, size = 0x1000, scoped, tag = 'input window, operand 7, single buffered']
    #allocation12 [shape = 's32[1]{0}', space=sflag, size = 0x4, scoped, tag = 'scoped memory for tpu_custom_call.1']
    #allocation13 [shape = 'u8[512]{0}', space=vmem, size = 0x400, scoped, tag = 'input window, operand 8, single buffered']
    #allocation14 [shape = 'u8[512]{0}', space=vmem, size = 0x400, scoped, tag = 'input window, operand 10, single buffered']
    #allocation15 [shape = 's32[1]{0}', space=sflag, size = 0x4, scoped, tag = 'scoped memory for tpu_custom_call.1']
    #allocation16 [shape = 'u8[32768]{0}', space=vmem, size = 0x8000, scoped, tag = 'input window, operand 14, single buffered']
    #allocation17 [shape = 'u8[1024]{0}', space=vmem, size = 0x400, scoped, tag = 'output window, operand 0']
    #allocation18 [shape = 'u8[4096]{0}', space=vmem, size = 0x1000, scoped, tag = 'output window, operand 1']
    #allocation19 [shape = 's32[2]{0}', space=sflag, size = 0x8, scoped, tag = 'scoped memory for tpu_custom_call.1']
    %23 = vsyncpa [#allocation3], 0
    %s24 = scalar_lea.sflag [#allocation3], 1
    %25 = vsyncpa %s24, 0
    %26 = vsyncpa [#allocation6], 0
    %s27 = scalar_lea.sflag [#allocation6], 1
    %28 = vsyncpa %s27, 0
    %29 = vsyncpa [#allocation9], 0
    %30 = vsyncpa [#allocation12], 0
    %31 = vsyncpa [#allocation15], 0
    %32 = vsyncpa [#allocation4], 0
    %s33 = scalar_lea.sflag [#allocation4], 1
    %34 = vsyncpa %s33, 0
    %35 = vsyncpa [#allocation19], 0
    %s36 = scalar_lea.sflag [#allocation19], 1
    %37 = vsyncpa %s36, 0
    loop: start=0, step=1, limit=6
    $region2: #{tpu_custom_call.1} parent=1 // loop_pre_header
      _
    $region3: #{tpu_custom_call.1} parent=1 // loop_header
      %s39 = sphi 0, %s43
      %p40 = scmp.ge.s32.totalorder %s39, 6
      %s49 = sphi 0, %s51
      %s52 = sphi 0, %s49
      %s53 = sphi 0, %s52
      %s69 = sphi 0, %s53
      %s75 = sphi 0, %s77
      %s78 = sphi 0, %s75
      %s79 = sphi 0, %s78
      %s95 = sphi 0, %s79
      %s99 = sphi 0, %s99
      %s101 = sphi 0, %s99
      %s102 = sphi 0, %s101
      %s116 = sphi 0, %s102
      %s120 = sphi 0, %s120
      %s122 = sphi 0, %s120
      %s123 = sphi 0, %s122
      %s137 = sphi 0, %s123
      %s141 = sphi 0, %s141
      %s143 = sphi 0, %s141
      %s144 = sphi 0, %s143
      %s158 = sphi 0, %s144
      %s162 = sphi 0, %s162
      %s164 = sphi 0, %s162
      %s165 = sphi 0, %s164
      %s179 = sphi 0, %s165
      %s183 = sphi 0, %s183
      %s185 = sphi 0, %s183
      %s186 = sphi 0, %s185
      %s200 = sphi 0, %s186
      %s204 = sphi 0, %s204
      %s206 = sphi 0, %s204
      %s207 = sphi 0, %s206
      %s221 = sphi 0, %s207
      %s225 = sphi 0, %s225
      %s227 = sphi 0, %s225
      %s228 = sphi 0, %s227
      %s242 = sphi 0, %s228
      %s246 = sphi 0, %s246
      %s248 = sphi 0, %s246
      %s249 = sphi 0, %s248
      %s263 = sphi 0, %s249
      %s267 = sphi 0, %s267
      %s269 = sphi 0, %s267
      %s270 = sphi 0, %s269
      %s284 = sphi 0, %s270
      %s288 = sphi 0, %s288
      %s290 = sphi 0, %s288
      %s291 = sphi 0, %s290
      %s305 = sphi 0, %s291
      %s309 = sphi 0, %s309
      %s311 = sphi 0, %s309
      %s312 = sphi 0, %s311
      %s326 = sphi 0, %s312
      %s330 = sphi 0, %s330
      %s332 = sphi 0, %s330
      %s333 = sphi 0, %s332
      %s347 = sphi 0, %s333
      %s351 = sphi 0, %s351
      %s353 = sphi 0, %s351
      %s354 = sphi 0, %s353
      %s368 = sphi 0, %s354
      %s372 = sphi 0, %s372
      %s374 = sphi 0, %s372
      %s375 = sphi 0, %s374
      %s389 = sphi 0, %s375
      %s395 = sphi 0, %s397
      %s398 = sphi 0, %s395
      %s399 = sphi 0, %s398
      %s415 = sphi 0, %s399
      %s421 = sphi 0, %s423
      %s424 = sphi 0, %s421
      %s425 = sphi 0, %s424
      %s441 = sphi 0, %s425
    $region4: #{tpu_custom_call.1} parent=1 // loop_header_branch
      %42 = sbr.rel (%p40) target = $region8
    $region5: #{tpu_custom_call.1} parent=1 // loop_body
      %s44 = ssub.s32 %s39, 1
      %s45 = ssub.s32 %s39, 2
      %s46 = sadd.s32 %s39, 1
      %s47 = ssub.s32 %s39, %s46
      %p48 = scmp.eq.s32.totalorder %s47, 0
      %s50 = sadd.s32 %s49, 1
      %s51 = scalar_select %p48, %s49, %s50
      %p54 = pneg %p48
      %p55 = scmp.eq.s32.totalorder %s39, 3
      %p56 = por %p54, %p55
      %p57 = scmp.ne.s32.totalorder %s49, %s52
      %p58 = scmp.eq.s32.totalorder %s39, 0
      %p59 = por %p57, %p58
      %p60 = scmp.ne.s32.totalorder %s49, %s52
      %p61 = scmp.eq.s32.totalorder %s44, 3
      %p62 = por %p60, %p61
      %p63 = scmp.ne.s32.totalorder %s52, %s53
      %p64 = scmp.eq.s32.totalorder %s44, 0
      %p65 = por %p63, %p64
      %p66 = scmp.ne.s32.totalorder %s52, %s53
      %p67 = scmp.eq.s32.totalorder %s45, 3
      %p68 = por %p66, %p67
      %p70 = scmp.ne.s32.totalorder %s53, %s69
      %p71 = scmp.eq.s32.totalorder %s45, 0
      %p72 = por %p70, %p71
      %s73 = ssub.s32 %s39, %s46
      %p74 = scmp.eq.s32.totalorder %s73, 0
      %s76 = sadd.s32 %s75, 1
      %s77 = scalar_select %p74, %s75, %s76
      %p80 = pneg %p74
      %p81 = scmp.eq.s32.totalorder %s39, 3
      %p82 = por %p80, %p81
      %p83 = scmp.ne.s32.totalorder %s75, %s78
      %p84 = scmp.eq.s32.totalorder %s39, 0
      %p85 = por %p83, %p84
      %p86 = scmp.ne.s32.totalorder %s75, %s78
      %p87 = scmp.eq.s32.totalorder %s44, 3
      %p88 = por %p86, %p87
      %p89 = scmp.ne.s32.totalorder %s78, %s79
      %p90 = scmp.eq.s32.totalorder %s44, 0
      %p91 = por %p89, %p90
      %p92 = scmp.ne.s32.totalorder %s78, %s79
      %p93 = scmp.eq.s32.totalorder %s45, 3
      %p94 = por %p92, %p93
      %p96 = scmp.ne.s32.totalorder %s79, %s95
      %p97 = scmp.eq.s32.totalorder %s45, 0
      %p98 = por %p96, %p97
      %s100 = sadd.s32 %s99, 1
      %p103 = scmp.eq.s32.totalorder %s39, 3
      %p104 = scmp.ne.s32.totalorder %s99, %s101
      %p105 = scmp.eq.s32.totalorder %s39, 0
      %p106 = por %p104, %p105
      %p107 = scmp.ne.s32.totalorder %s99, %s101
      %p108 = scmp.eq.s32.totalorder %s44, 3
      %p109 = por %p107, %p108
      %p110 = scmp.ne.s32.totalorder %s101, %s102
      %p111 = scmp.eq.s32.totalorder %s44, 0
      %p112 = por %p110, %p111
      %p113 = scmp.ne.s32.totalorder %s101, %s102
      %p114 = scmp.eq.s32.totalorder %s45, 3
      %p115 = por %p113, %p114
      %p117 = scmp.ne.s32.totalorder %s102, %s116
      %p118 = scmp.eq.s32.totalorder %s45, 0
      %p119 = por %p117, %p118
      %s121 = sadd.s32 %s120, 1
      %p124 = scmp.eq.s32.totalorder %s39, 3
      %p125 = scmp.ne.s32.totalorder %s120, %s122
      %p126 = scmp.eq.s32.totalorder %s39, 0
      %p127 = por %p125, %p126
      %p128 = scmp.ne.s32.totalorder %s120, %s122
      %p129 = scmp.eq.s32.totalorder %s44, 3
      %p130 = por %p128, %p129
      %p131 = scmp.ne.s32.totalorder %s122, %s123
      %p132 = scmp.eq.s32.totalorder %s44, 0
      %p133 = por %p131, %p132
      %p134 = scmp.ne.s32.totalorder %s122, %s123
      %p135 = scmp.eq.s32.totalorder %s45, 3
      %p136 = por %p134, %p135
      %p138 = scmp.ne.s32.totalorder %s123, %s137
      %p139 = scmp.eq.s32.totalorder %s45, 0
      %p140 = por %p138, %p139
      %s142 = sadd.s32 %s141, 1
      %p145 = scmp.eq.s32.totalorder %s39, 3
      %p146 = scmp.ne.s32.totalorder %s141, %s143
      %p147 = scmp.eq.s32.totalorder %s39, 0
      %p148 = por %p146, %p147
      %p149 = scmp.ne.s32.totalorder %s141, %s143
      %p150 = scmp.eq.s32.totalorder %s44, 3
      %p151 = por %p149, %p150
      %p152 = scmp.ne.s32.totalorder %s143, %s144
      %p153 = scmp.eq.s32.totalorder %s44, 0
      %p154 = por %p152, %p153
      %p155 = scmp.ne.s32.totalorder %s143, %s144
      %p156 = scmp.eq.s32.totalorder %s45, 3
      %p157 = por %p155, %p156
      %p159 = scmp.ne.s32.totalorder %s144, %s158
      %p160 = scmp.eq.s32.totalorder %s45, 0
      %p161 = por %p159, %p160
      %s163 = sadd.s32 %s162, 1
      %p166 = scmp.eq.s32.totalorder %s39, 3
      %p167 = scmp.ne.s32.totalorder %s162, %s164
      %p168 = scmp.eq.s32.totalorder %s39, 0
      %p169 = por %p167, %p168
      %p170 = scmp.ne.s32.totalorder %s162, %s164
      %p171 = scmp.eq.s32.totalorder %s44, 3
      %p172 = por %p170, %p171
      %p173 = scmp.ne.s32.totalorder %s164, %s165
      %p174 = scmp.eq.s32.totalorder %s44, 0
      %p175 = por %p173, %p174
      %p176 = scmp.ne.s32.totalorder %s164, %s165
      %p177 = scmp.eq.s32.totalorder %s45, 3
      %p178 = por %p176, %p177
      %p180 = scmp.ne.s32.totalorder %s165, %s179
      %p181 = scmp.eq.s32.totalorder %s45, 0
      %p182 = por %p180, %p181
      %s184 = sadd.s32 %s183, 1
      %p187 = scmp.eq.s32.totalorder %s39, 3
      %p188 = scmp.ne.s32.totalorder %s183, %s185
      %p189 = scmp.eq.s32.totalorder %s39, 0
      %p190 = por %p188, %p189
      %p191 = scmp.ne.s32.totalorder %s183, %s185
      %p192 = scmp.eq.s32.totalorder %s44, 3
      %p193 = por %p191, %p192
      %p194 = scmp.ne.s32.totalorder %s185, %s186
      %p195 = scmp.eq.s32.totalorder %s44, 0
      %p196 = por %p194, %p195
      %p197 = scmp.ne.s32.totalorder %s185, %s186
      %p198 = scmp.eq.s32.totalorder %s45, 3
      %p199 = por %p197, %p198
      %p201 = scmp.ne.s32.totalorder %s186, %s200
      %p202 = scmp.eq.s32.totalorder %s45, 0
      %p203 = por %p201, %p202
      %s205 = sadd.s32 %s204, 1
      %p208 = scmp.eq.s32.totalorder %s39, 3
      %p209 = scmp.ne.s32.totalorder %s204, %s206
      %p210 = scmp.eq.s32.totalorder %s39, 0
      %p211 = por %p209, %p210
      %p212 = scmp.ne.s32.totalorder %s204, %s206
      %p213 = scmp.eq.s32.totalorder %s44, 3
      %p214 = por %p212, %p213
      %p215 = scmp.ne.s32.totalorder %s206, %s207
      %p216 = scmp.eq.s32.totalorder %s44, 0
      %p217 = por %p215, %p216
      %p218 = scmp.ne.s32.totalorder %s206, %s207
      %p219 = scmp.eq.s32.totalorder %s45, 3
      %p220 = por %p218, %p219
      %p222 = scmp.ne.s32.totalorder %s207, %s221
      %p223 = scmp.eq.s32.totalorder %s45, 0
      %p224 = por %p222, %p223
      %s226 = sadd.s32 %s225, 1
      %p229 = scmp.eq.s32.totalorder %s39, 3
      %p230 = scmp.ne.s32.totalorder %s225, %s227
      %p231 = scmp.eq.s32.totalorder %s39, 0
      %p232 = por %p230, %p231
      %p233 = scmp.ne.s32.totalorder %s225, %s227
      %p234 = scmp.eq.s32.totalorder %s44, 3
      %p235 = por %p233, %p234
      %p236 = scmp.ne.s32.totalorder %s227, %s228
      %p237 = scmp.eq.s32.totalorder %s44, 0
      %p238 = por %p236, %p237
      %p239 = scmp.ne.s32.totalorder %s227, %s228
      %p240 = scmp.eq.s32.totalorder %s45, 3
      %p241 = por %p239, %p240
      %p243 = scmp.ne.s32.totalorder %s228, %s242
      %p244 = scmp.eq.s32.totalorder %s45, 0
      %p245 = por %p243, %p244
      %s247 = sadd.s32 %s246, 1
      %p250 = scmp.eq.s32.totalorder %s39, 3
      %p251 = scmp.ne.s32.totalorder %s246, %s248
      %p252 = scmp.eq.s32.totalorder %s39, 0
      %p253 = por %p251, %p252
      %p254 = scmp.ne.s32.totalorder %s246, %s248
      %p255 = scmp.eq.s32.totalorder %s44, 3
      %p256 = por %p254, %p255
      %p257 = scmp.ne.s32.totalorder %s248, %s249
      %p258 = scmp.eq.s32.totalorder %s44, 0
      %p259 = por %p257, %p258
      %p260 = scmp.ne.s32.totalorder %s248, %s249
      %p261 = scmp.eq.s32.totalorder %s45, 3
      %p262 = por %p260, %p261
      %p264 = scmp.ne.s32.totalorder %s249, %s263
      %p265 = scmp.eq.s32.totalorder %s45, 0
      %p266 = por %p264, %p265
      %s268 = sadd.s32 %s267, 1
      %p271 = scmp.eq.s32.totalorder %s39, 3
      %p272 = scmp.ne.s32.totalorder %s267, %s269
      %p273 = scmp.eq.s32.totalorder %s39, 0
      %p274 = por %p272, %p273
      %p275 = scmp.ne.s32.totalorder %s267, %s269
      %p276 = scmp.eq.s32.totalorder %s44, 3
      %p277 = por %p275, %p276
      %p278 = scmp.ne.s32.totalorder %s269, %s270
      %p279 = scmp.eq.s32.totalorder %s44, 0
      %p280 = por %p278, %p279
      %p281 = scmp.ne.s32.totalorder %s269, %s270
      %p282 = scmp.eq.s32.totalorder %s45, 3
      %p283 = por %p281, %p282
      %p285 = scmp.ne.s32.totalorder %s270, %s284
      %p286 = scmp.eq.s32.totalorder %s45, 0
      %p287 = por %p285, %p286
      %s289 = sadd.s32 %s288, 1
      %p292 = scmp.eq.s32.totalorder %s39, 3
      %p293 = scmp.ne.s32.totalorder %s288, %s290
      %p294 = scmp.eq.s32.totalorder %s39, 0
      %p295 = por %p293, %p294
      %p296 = scmp.ne.s32.totalorder %s288, %s290
      %p297 = scmp.eq.s32.totalorder %s44, 3
      %p298 = por %p296, %p297
      %p299 = scmp.ne.s32.totalorder %s290, %s291
      %p300 = scmp.eq.s32.totalorder %s44, 0
      %p301 = por %p299, %p300
      %p302 = scmp.ne.s32.totalorder %s290, %s291
      %p303 = scmp.eq.s32.totalorder %s45, 3
      %p304 = por %p302, %p303
      %p306 = scmp.ne.s32.totalorder %s291, %s305
      %p307 = scmp.eq.s32.totalorder %s45, 0
      %p308 = por %p306, %p307
      %s310 = sadd.s32 %s309, 1
      %p313 = scmp.eq.s32.totalorder %s39, 3
      %p314 = scmp.ne.s32.totalorder %s309, %s311
      %p315 = scmp.eq.s32.totalorder %s39, 0
      %p316 = por %p314, %p315
      %p317 = scmp.ne.s32.totalorder %s309, %s311
      %p318 = scmp.eq.s32.totalorder %s44, 3
      %p319 = por %p317, %p318
      %p320 = scmp.ne.s32.totalorder %s311, %s312
      %p321 = scmp.eq.s32.totalorder %s44, 0
      %p322 = por %p320, %p321
      %p323 = scmp.ne.s32.totalorder %s311, %s312
      %p324 = scmp.eq.s32.totalorder %s45, 3
      %p325 = por %p323, %p324
      %p327 = scmp.ne.s32.totalorder %s312, %s326
      %p328 = scmp.eq.s32.totalorder %s45, 0
      %p329 = por %p327, %p328
      %s331 = sadd.s32 %s330, 1
      %p334 = scmp.eq.s32.totalorder %s39, 3
      %p335 = scmp.ne.s32.totalorder %s330, %s332
      %p336 = scmp.eq.s32.totalorder %s39, 0
      %p337 = por %p335, %p336
      %p338 = scmp.ne.s32.totalorder %s330, %s332
      %p339 = scmp.eq.s32.totalorder %s44, 3
      %p340 = por %p338, %p339
      %p341 = scmp.ne.s32.totalorder %s332, %s333
      %p342 = scmp.eq.s32.totalorder %s44, 0
      %p343 = por %p341, %p342
      %p344 = scmp.ne.s32.totalorder %s332, %s333
      %p345 = scmp.eq.s32.totalorder %s45, 3
      %p346 = por %p344, %p345
      %p348 = scmp.ne.s32.totalorder %s333, %s347
      %p349 = scmp.eq.s32.totalorder %s45, 0
      %p350 = por %p348, %p349
      %s352 = sadd.s32 %s351, 1
      %p355 = scmp.eq.s32.totalorder %s39, 3
      %p356 = scmp.ne.s32.totalorder %s351, %s353
      %p357 = scmp.eq.s32.totalorder %s39, 0
      %p358 = por %p356, %p357
      %p359 = scmp.ne.s32.totalorder %s351, %s353
      %p360 = scmp.eq.s32.totalorder %s44, 3
      %p361 = por %p359, %p360
      %p362 = scmp.ne.s32.totalorder %s353, %s354
      %p363 = scmp.eq.s32.totalorder %s44, 0
      %p364 = por %p362, %p363
      %p365 = scmp.ne.s32.totalorder %s353, %s354
      %p366 = scmp.eq.s32.totalorder %s45, 3
      %p367 = por %p365, %p366
      %p369 = scmp.ne.s32.totalorder %s354, %s368
      %p370 = scmp.eq.s32.totalorder %s45, 0
      %p371 = por %p369, %p370
      %s373 = sadd.s32 %s372, 1
      %p376 = scmp.eq.s32.totalorder %s39, 3
      %p377 = scmp.ne.s32.totalorder %s372, %s374
      %p378 = scmp.eq.s32.totalorder %s39, 0
      %p379 = por %p377, %p378
      %p380 = scmp.ne.s32.totalorder %s372, %s374
      %p381 = scmp.eq.s32.totalorder %s44, 3
      %p382 = por %p380, %p381
      %p383 = scmp.ne.s32.totalorder %s374, %s375
      %p384 = scmp.eq.s32.totalorder %s44, 0
      %p385 = por %p383, %p384
      %p386 = scmp.ne.s32.totalorder %s374, %s375
      %p387 = scmp.eq.s32.totalorder %s45, 3
      %p388 = por %p386, %p387
      %p390 = scmp.ne.s32.totalorder %s375, %s389
      %p391 = scmp.eq.s32.totalorder %s45, 0
      %p392 = por %p390, %p391
      %s393 = ssub.s32 %s39, %s46
      %p394 = scmp.eq.s32.totalorder %s393, 0
      %s396 = sadd.s32 %s395, 1
      %s397 = scalar_select %p394, %s395, %s396
      %p400 = pneg %p394
      %p401 = scmp.eq.s32.totalorder %s39, 3
      %p402 = por %p400, %p401
      %p403 = scmp.ne.s32.totalorder %s395, %s398
      %p404 = scmp.eq.s32.totalorder %s39, 0
      %p405 = por %p403, %p404
      %p406 = scmp.ne.s32.totalorder %s395, %s398
      %p407 = scmp.eq.s32.totalorder %s44, 3
      %p408 = por %p406, %p407
      %p409 = scmp.ne.s32.totalorder %s398, %s399
      %p410 = scmp.eq.s32.totalorder %s44, 0
      %p411 = por %p409, %p410
      %p412 = scmp.ne.s32.totalorder %s398, %s399
      %p413 = scmp.eq.s32.totalorder %s45, 3
      %p414 = por %p412, %p413
      %p416 = scmp.ne.s32.totalorder %s399, %s415
      %p417 = scmp.eq.s32.totalorder %s45, 0
      %p418 = por %p416, %p417
      %s419 = ssub.s32 %s39, %s46
      %p420 = scmp.eq.s32.totalorder %s419, 0
      %s422 = sadd.s32 %s421, 1
      %s423 = scalar_select %p420, %s421, %s422
      %p426 = pneg %p420
      %p427 = scmp.eq.s32.totalorder %s39, 3
      %p428 = por %p426, %p427
      %p429 = scmp.ne.s32.totalorder %s421, %s424
      %p430 = scmp.eq.s32.totalorder %s39, 0
      %p431 = por %p429, %p430
      %p432 = scmp.ne.s32.totalorder %s421, %s424
      %p433 = scmp.eq.s32.totalorder %s44, 3
      %p434 = por %p432, %p433
      %p435 = scmp.ne.s32.totalorder %s424, %s425
      %p436 = scmp.eq.s32.totalorder %s44, 0
      %p437 = por %p435, %p436
      %p438 = scmp.ne.s32.totalorder %s424, %s425
      %p439 = scmp.eq.s32.totalorder %s45, 3
      %p440 = por %p438, %p439
      %p442 = scmp.ne.s32.totalorder %s425, %s441
      %p443 = scmp.eq.s32.totalorder %s45, 0
      %p444 = por %p442, %p443
      %p445 = scmp.le.s32.totalorder 1, %s39
      %p446 = scmp.lt.s32.totalorder %s39, 5
      %p447 = pnand %p445, %p446
      %p448 = pneg %p447
      // Predicated region
      $region9: #{tpu_custom_call.1} parent=5 // pred_check
        _
      $region10: #{tpu_custom_call.1} parent=5 // pred_check_branch
        %450 = sbr.rel (%p447) target = $region12
      $region11: #{tpu_custom_call.1} parent=5 // pred_region
        %s451 = ssub.s32 %s39, 1
        // Predicated region
        $region13: #{tpu_custom_call.1} parent=11 // pred_check
          %p452 = pneg %p112
        $region14: #{tpu_custom_call.1} parent=11 // pred_check_branch
          %454 = sbr.rel (%p452) target = $region16
        $region15: #{tpu_custom_call.1} parent=11 // pred_region
          %s456 = ssub.s32 128, 128
          %457 = vsyncadd [#allocation6], %s456
          %s458 = sshll.u32 [#allocation7], 4
          %s459 = int_to_ptr.vmem [resolvable:$true] %s458
          %464 = dma.hbm_to_vmem [thread:$0]  %s2, 128, %s459, [#allocation6], 64, 64, 4
        $region16: #{tpu_custom_call.1} parent=11 // pred_fallthru
          _
        // Predicated region
        $region17: #{tpu_custom_call.1} parent=11 // pred_check
          %p465 = pneg %p133
        $region18: #{tpu_custom_call.1} parent=11 // pred_check_branch
          %467 = sbr.rel (%p465) target = $region20
        $region19: #{tpu_custom_call.1} parent=11 // pred_region
          _
        $region20: #{tpu_custom_call.1} parent=11 // pred_fallthru
          _
        // Predicated region
        $region21: #{tpu_custom_call.1} parent=11 // pred_check
          %p468 = pneg %p154
        $region22: #{tpu_custom_call.1} parent=11 // pred_check_branch
          %470 = sbr.rel (%p468) target = $region24
        $region23: #{tpu_custom_call.1} parent=11 // pred_region
          _
        $region24: #{tpu_custom_call.1} parent=11 // pred_fallthru
          _
        // Predicated region
        $region25: #{tpu_custom_call.1} parent=11 // pred_check
          %p471 = pneg %p175
        $region26: #{tpu_custom_call.1} parent=11 // pred_check_branch
          %473 = sbr.rel (%p471) target = $region28
        $region27: #{tpu_custom_call.1} parent=11 // pred_region
          %s475 = ssub.s32 16, 16
          %476 = vsyncadd [#allocation9], %s475
          %s478 = sshll.u32 [#allocation8], 4
          %s479 = int_to_ptr.vmem [resolvable:$true] %s478
          %481 = dma.hbm_to_vmem [thread:$0]  %s5, 16, %s479, [#allocation9]
        $region28: #{tpu_custom_call.1} parent=11 // pred_fallthru
          _
        // Predicated region
        $region29: #{tpu_custom_call.1} parent=11 // pred_check
          %p482 = pneg %p196
        $region30: #{tpu_custom_call.1} parent=11 // pred_check_branch
          %484 = sbr.rel (%p482) target = $region32
        $region31: #{tpu_custom_call.1} parent=11 // pred_region
          %s486 = ssub.s32 128, 128
          %487 = vsyncadd [#allocation9], %s486
          %s488 = sshll.u32 [#allocation10], 4
          %s489 = int_to_ptr.vmem [resolvable:$true] %s488
          %494 = dma.hbm_to_vmem [thread:$0]  %s6, 128, %s489, [#allocation9], 64, 64, 4
        $region32: #{tpu_custom_call.1} parent=11 // pred_fallthru
          _
        // Predicated region
        $region33: #{tpu_custom_call.1} parent=11 // pred_check
          %p495 = pneg %p217
        $region34: #{tpu_custom_call.1} parent=11 // pred_check_branch
          %497 = sbr.rel (%p495) target = $region36
        $region35: #{tpu_custom_call.1} parent=11 // pred_region
          %s499 = ssub.s32 128, 128
          %500 = vsyncadd [#allocation12], %s499
          %s501 = sshll.u32 [#allocation11], 4
          %s502 = int_to_ptr.vmem [resolvable:$true] %s501
          %507 = dma.hbm_to_vmem [thread:$0]  %s7, 128, %s502, [#allocation12], 64, 64, 4
        $region36: #{tpu_custom_call.1} parent=11 // pred_fallthru
          _
        // Predicated region
        $region37: #{tpu_custom_call.1} parent=11 // pred_check
          %p508 = pneg %p238
        $region38: #{tpu_custom_call.1} parent=11 // pred_check_branch
          %510 = sbr.rel (%p508) target = $region40
        $region39: #{tpu_custom_call.1} parent=11 // pred_region
          %s512 = ssub.s32 16, 16
          %513 = vsyncadd [#allocation12], %s512
          %s515 = sshll.u32 [#allocation13], 4
          %s516 = int_to_ptr.vmem [resolvable:$true] %s515
          %518 = dma.hbm_to_vmem [thread:$0]  %s8, 16, %s516, [#allocation12]
        $region40: #{tpu_custom_call.1} parent=11 // pred_fallthru
          _
        // Predicated region
        $region41: #{tpu_custom_call.1} parent=11 // pred_check
          %p519 = pneg %p259
        $region42: #{tpu_custom_call.1} parent=11 // pred_check_branch
          %521 = sbr.rel (%p519) target = $region44
        $region43: #{tpu_custom_call.1} parent=11 // pred_region
          _
        $region44: #{tpu_custom_call.1} parent=11 // pred_fallthru
          _
        // Predicated region
        $region45: #{tpu_custom_call.1} parent=11 // pred_check
          %p522 = pneg %p280
        $region46: #{tpu_custom_call.1} parent=11 // pred_check_branch
          %524 = sbr.rel (%p522) target = $region48
        $region47: #{tpu_custom_call.1} parent=11 // pred_region
          %s526 = ssub.s32 16, 16
          %527 = vsyncadd [#allocation15], %s526
          %s529 = sshll.u32 [#allocation14], 4
          %s530 = int_to_ptr.vmem [resolvable:$true] %s529
          %532 = dma.hbm_to_vmem [thread:$0]  %s10, 16, %s530, [#allocation15]
        $region48: #{tpu_custom_call.1} parent=11 // pred_fallthru
          _
        // Predicated region
        $region49: #{tpu_custom_call.1} parent=11 // pred_check
          %p533 = pneg %p301
        $region50: #{tpu_custom_call.1} parent=11 // pred_check_branch
          %535 = sbr.rel (%p533) target = $region52
        $region51: #{tpu_custom_call.1} parent=11 // pred_region
          _
        $region52: #{tpu_custom_call.1} parent=11 // pred_fallthru
          _
        // Predicated region
        $region53: #{tpu_custom_call.1} parent=11 // pred_check
          %p536 = pneg %p322
        $region54: #{tpu_custom_call.1} parent=11 // pred_check_branch
          %538 = sbr.rel (%p536) target = $region56
        $region55: #{tpu_custom_call.1} parent=11 // pred_region
          _
        $region56: #{tpu_custom_call.1} parent=11 // pred_fallthru
          _
        // Predicated region
        $region57: #{tpu_custom_call.1} parent=11 // pred_check
          %p539 = pneg %p343
        $region58: #{tpu_custom_call.1} parent=11 // pred_check_branch
          %541 = sbr.rel (%p539) target = $region60
        $region59: #{tpu_custom_call.1} parent=11 // pred_region
          _
        $region60: #{tpu_custom_call.1} parent=11 // pred_fallthru
          _
        // Predicated region
        $region61: #{tpu_custom_call.1} parent=11 // pred_check
          %p542 = pneg %p364
        $region62: #{tpu_custom_call.1} parent=11 // pred_check_branch
          %544 = sbr.rel (%p542) target = $region64
        $region63: #{tpu_custom_call.1} parent=11 // pred_region
          %s546 = ssub.s32 1024, 1024
          %547 = vsyncadd [#allocation15], %s546
          %s548 = sshll.u32 [#allocation16], 4
          %s549 = int_to_ptr.vmem [resolvable:$true] %s548
          %554 = dma.hbm_to_vmem [thread:$0]  %s14, 1024, %s549, [#allocation15], 64, 64, 4
        $region64: #{tpu_custom_call.1} parent=11 // pred_fallthru
          _
        // Predicated region
        $region65: #{tpu_custom_call.1} parent=11 // pred_check
          %p555 = pneg %p385
        $region66: #{tpu_custom_call.1} parent=11 // pred_check_branch
          %557 = sbr.rel (%p555) target = $region68
        $region67: #{tpu_custom_call.1} parent=11 // pred_region
          _
        $region68: #{tpu_custom_call.1} parent=11 // pred_fallthru
          _
      $region12: #{tpu_custom_call.1} parent=5 // pred_fallthru
        _
      %p558 = scmp.lt.s32.totalorder %s39, 4
      // Predicated region
      $region69: #{tpu_custom_call.1} parent=5 // pred_check
        %p559 = pneg %p558
      $region70: #{tpu_custom_call.1} parent=5 // pred_check_branch
        %561 = sbr.rel (%p559) target = $region72
      $region71: #{tpu_custom_call.1} parent=5 // pred_region
        // Predicated region
        $region73: #{tpu_custom_call.1} parent=71 // pred_check
          %p562 = pneg %p59
        $region74: #{tpu_custom_call.1} parent=71 // pred_check_branch
          %564 = sbr.rel (%p562) target = $region76
        $region75: #{tpu_custom_call.1} parent=71 // pred_region
          %s565 = sand.u32 %s49, 1
          %s566 = scalar_lea.sflag [#allocation3], %s565
          %s567 = sand.u32 %s49, 1
          %s568 = smul.addr %s567, 4
          %s569 = scalar_lea.vmem [#allocation2], %s568
          %s571 = ssub.s32 64, 64
          %572 = vsyncadd %s566, %s571
          %s573 = smul.addr %s39, 64
          %s574 = scalar_lea.hbm %s0, %s573
          %s576 = sshll.u32 %s569, 4
          %s577 = int_to_ptr.vmem [resolvable:$true] %s576
          %579 = dma.hbm_to_vmem [thread:$0]  %s574, 64, %s577, %s566
        $region76: #{tpu_custom_call.1} parent=71 // pred_fallthru
          _
        // Predicated region
        $region77: #{tpu_custom_call.1} parent=71 // pred_check
          %p580 = pneg %p85
        $region78: #{tpu_custom_call.1} parent=71 // pred_check_branch
          %582 = sbr.rel (%p580) target = $region80
        $region79: #{tpu_custom_call.1} parent=71 // pred_region
          %s583 = sand.u32 %s39, 1
          %s584 = scalar_lea.sflag [#allocation6], %s583
          %s585 = sand.u32 %s75, 1
          %s586 = smul.addr %s585, 4
          %s587 = scalar_lea.vmem [#allocation5], %s586
          %s589 = ssub.s32 64, 64
          %590 = vsyncadd %s584, %s589
          %s591 = smul.addr %s39, 64
          %s592 = scalar_lea.hbm %s1, %s591
          %s594 = sshll.u32 %s587, 4
          %s595 = int_to_ptr.vmem [resolvable:$true] %s594
          %597 = dma.hbm_to_vmem [thread:$0]  %s592, 64, %s595, %s584
        $region80: #{tpu_custom_call.1} parent=71 // pred_fallthru
          _
      $region72: #{tpu_custom_call.1} parent=5 // pred_fallthru
        _
      %p598 = scmp.le.s32.totalorder 1, %s39
      %p599 = scmp.lt.s32.totalorder %s39, 5
      %p600 = pnand %p598, %p599
      %p601 = pneg %p600
      // Predicated region
      $region81: #{tpu_custom_call.1} parent=5 // pred_check
        _
      $region82: #{tpu_custom_call.1} parent=5 // pred_check_branch
        %603 = sbr.rel (%p600) target = $region84
      $region83: #{tpu_custom_call.1} parent=5 // pred_region
        %s604 = ssub.s32 %s39, 1
        %s605 = sand.u32 %s52, 1
        %s606 = scalar_lea.sflag [#allocation3], %s605
        %s607 = sand.u32 %s52, 1
        %s608 = smul.addr %s607, 4
        %s609 = scalar_lea.vmem [#allocation2], %s608
        // Predicated region
        $region85: #{tpu_custom_call.1} parent=83 // pred_check
          %p610 = pneg %p65
        $region86: #{tpu_custom_call.1} parent=83 // pred_check_branch
          %612 = sbr.rel (%p610) target = $region88
        $region87: #{tpu_custom_call.1} parent=83 // pred_region
          %613 = dma.done %s606, 64
        $region88: #{tpu_custom_call.1} parent=83 // pred_fallthru
          _
        %s614 = sand.u32 %s44, 1
        %s615 = scalar_lea.sflag [#allocation6], %s614
        %s616 = sand.u32 %s78, 1
        %s617 = smul.addr %s616, 4
        %s618 = scalar_lea.vmem [#allocation5], %s617
        // Predicated region
        $region89: #{tpu_custom_call.1} parent=83 // pred_check
          %p619 = pneg %p91
        $region90: #{tpu_custom_call.1} parent=83 // pred_check_branch
          %621 = sbr.rel (%p619) target = $region92
        $region91: #{tpu_custom_call.1} parent=83 // pred_region
          %622 = dma.done %s615, 64
        $region92: #{tpu_custom_call.1} parent=83 // pred_fallthru
          _
        // Predicated region
        $region93: #{tpu_custom_call.1} parent=83 // pred_check
          %p623 = pneg %p112
        $region94: #{tpu_custom_call.1} parent=83 // pred_check_branch
          %625 = sbr.rel (%p623) target = $region96
        $region95: #{tpu_custom_call.1} parent=83 // pred_region
          %626 = dma.done [#allocation6], 128
        $region96: #{tpu_custom_call.1} parent=83 // pred_fallthru
          _
        // Predicated region
        $region97: #{tpu_custom_call.1} parent=83 // pred_check
          %p627 = pneg %p175
        $region98: #{tpu_custom_call.1} parent=83 // pred_check_branch
          %629 = sbr.rel (%p627) target = $region100
        $region99: #{tpu_custom_call.1} parent=83 // pred_region
          %630 = dma.done [#allocation9], 16
        $region100: #{tpu_custom_call.1} parent=83 // pred_fallthru
          _
        // Predicated region
        $region101: #{tpu_custom_call.1} parent=83 // pred_check
          %p631 = pneg %p196
        $region102: #{tpu_custom_call.1} parent=83 // pred_check_branch
          %633 = sbr.rel (%p631) target = $region104
        $region103: #{tpu_custom_call.1} parent=83 // pred_region
          %634 = dma.done [#allocation9], 128
        $region104: #{tpu_custom_call.1} parent=83 // pred_fallthru
          _
        // Predicated region
        $region105: #{tpu_custom_call.1} parent=83 // pred_check
          %p635 = pneg %p217
        $region106: #{tpu_custom_call.1} parent=83 // pred_check_branch
          %637 = sbr.rel (%p635) target = $region108
        $region107: #{tpu_custom_call.1} parent=83 // pred_region
          %638 = dma.done [#allocation12], 128
        $region108: #{tpu_custom_call.1} parent=83 // pred_fallthru
          _
        // Predicated region
        $region109: #{tpu_custom_call.1} parent=83 // pred_check
          %p639 = pneg %p238
        $region110: #{tpu_custom_call.1} parent=83 // pred_check_branch
          %641 = sbr.rel (%p639) target = $region112
        $region111: #{tpu_custom_call.1} parent=83 // pred_region
          %642 = dma.done [#allocation12], 16
        $region112: #{tpu_custom_call.1} parent=83 // pred_fallthru
          _
        // Predicated region
        $region113: #{tpu_custom_call.1} parent=83 // pred_check
          %p643 = pneg %p280
        $region114: #{tpu_custom_call.1} parent=83 // pred_check_branch
          %645 = sbr.rel (%p643) target = $region116
        $region115: #{tpu_custom_call.1} parent=83 // pred_region
          %646 = dma.done [#allocation15], 16
        $region116: #{tpu_custom_call.1} parent=83 // pred_fallthru
          _
        // Predicated region
        $region117: #{tpu_custom_call.1} parent=83 // pred_check
          %p647 = pneg %p364
        $region118: #{tpu_custom_call.1} parent=83 // pred_check_branch
          %649 = sbr.rel (%p647) target = $region120
        $region119: #{tpu_custom_call.1} parent=83 // pred_region
          %650 = dma.done [#allocation15], 1024
        $region120: #{tpu_custom_call.1} parent=83 // pred_fallthru
          _
        %s651 = sand.u32 %s52, 1
        %s652 = scalar_lea.sflag [#allocation3], %s651
        %s653 = sand.u32 %s52, 1
        %s654 = smul.addr %s653, 4
        %s655 = scalar_lea.vmem [#allocation2], %s654
        %p656 = pneg %p65
        %p657 = pneg %p62
        %s658 = sand.u32 %s44, 1
        %s659 = scalar_lea.sflag [#allocation6], %s658
        %s660 = sand.u32 %s78, 1
        %s661 = smul.addr %s660, 4
        %s662 = scalar_lea.vmem [#allocation5], %s661
        %p663 = pneg %p91
        %p664 = pneg %p88
        %p665 = pneg %p112
        %p666 = pneg %p109
        %p667 = pneg %p133
        %p668 = pneg %p130
        %p669 = pneg %p154
        %p670 = pneg %p151
        %p671 = pneg %p175
        %p672 = pneg %p172
        %p673 = pneg %p196
        %p674 = pneg %p193
        %p675 = pneg %p217
        %p676 = pneg %p214
        %p677 = pneg %p238
        %p678 = pneg %p235
        %p679 = pneg %p259
        %p680 = pneg %p256
        %p681 = pneg %p280
        %p682 = pneg %p277
        %p683 = pneg %p301
        %p684 = pneg %p298
        %p685 = pneg %p322
        %p686 = pneg %p319
        %p687 = pneg %p343
        %p688 = pneg %p340
        %p689 = pneg %p364
        %p690 = pneg %p361
        %p691 = pneg %p385
        %p692 = pneg %p382
        %p693 = pneg %p411
        %p694 = pneg %p408
        %s695 = sand.u32 %s398, 1
        %s696 = scalar_lea.sflag [#allocation4], %s695
        %s697 = sand.u32 %s398, 1
        %s698 = scalar_lea.vmem [#allocation17], %s697
        %p699 = pneg %p437
        %p700 = pneg %p434
        %s701 = sand.u32 %s424, 1
        %s702 = scalar_lea.sflag [#allocation19], %s701
        %s703 = sand.u32 %s424, 1
        %s704 = smul.addr %s703, 4
        %s705 = scalar_lea.vmem [#allocation18], %s704
        %v707 = vld [vmem:[%s609] sm:$0xf]
        %v708 = vld [vmem:[%s618] sm:$0xf]
        %v709 = vld [vmem:[#allocation7] sm:$0xf]
        %v710 = vld [vmem:[#allocation7 + $0x4] sm:$0xf]
        %v713 = vunpack.c.l.b16 %v709
        %v714 = vunpack.c.l.b16 %v710
        %v715 = vpack.c.b16 %v714, %v713
        %vm717 = vcmask 130048
        %v719 = vsel %vm717, %v707, 0
        %721 = vmatprep.subr.bf16.mxu0 0
        %722 = vmatpush1.bf16.msra.mxu0 %v715
        %723 = vmatprep.subr.bf16.mxu0 0
        %724 = vmatpush1.bf16.msra.mxu0 0
        %725 = vmatprep.subr.bf16.mxu0 0
        %726 = vmatpush1.bf16.msra.mxu0 0
        %727 = vmatprep.subr.bf16.mxu0 0
        %728 = vmatpush1.bf16.msra.mxu0 0
        %729 = vmatprep.subr.bf16.mxu0 0
        %730 = vmatpush1.bf16.msra.mxu0 0
        %731 = vmatprep.subr.bf16.mxu0 0
        %732 = vmatpush1.bf16.msra.mxu0 0
        %733 = vmatprep.subr.bf16.mxu0 0
        %734 = vmatpush1.bf16.msra.mxu0 0
        %735 = vmatprep.subr.bf16.mxu0 0
        %736 = vmatpush1.bf16.msra.mxu0 0
        %737 = vmatprep.subr.bf16.mxu0 0
        %738 = vmatpush1.bf16.msra.mxu0 0
        %739 = vmatprep.subr.bf16.mxu0 0
        %740 = vmatpush1.bf16.msra.mxu0 0
        %741 = vmatprep.subr.bf16.mxu0 0
        %742 = vmatpush1.bf16.msra.mxu0 0
        %743 = vmatprep.subr.bf16.mxu0 0
        %744 = vmatpush1.bf16.msra.mxu0 0
        %745 = vmatprep.subr.bf16.mxu0 0
        %746 = vmatpush1.bf16.msra.mxu0 0
        %747 = vmatprep.subr.bf16.mxu0 0
        %748 = vmatpush1.bf16.msra.mxu0 0
        %749 = vmatprep.subr.bf16.mxu0 0
        %750 = vmatpush1.bf16.msra.mxu0 0
        %751 = vmatprep.subr.bf16.mxu0 0
        %752 = vmatpush1.bf16.msra.mxu0 0
        %753 = vmatprep.mubr.bf16.mxu0 0
        %754 = vmatmul.mubr.bf16.gmra.mrb[0].mxu0 %v719
        %v755 = vpop.f32.mrb[0].mxu0
        %v756 = vadd.f32 0.0, %v755
        %v757 = vpop.f32.mrb[0].mxu0
        %v758 = vpop.f32.mrb[0].mxu0
        %v759 = vpop.f32.mrb[0].mxu0
        %760 = vdwg.mxu0
        %v761 = vpack.c.bf16 %v756, %v756
        %v762 = vld [vmem:[%s3] sm:$0x1]
        %v764 = vlaneseq
        %v765 = vshrl.u32 %v764, 7
        %v766 = vsub.s32 0, %v765
        %v767 = vrot.slane %v762, %v766
        %vm769 = vcmask 64512
        %v771 = vsel %vm769, %v708, 0
        %vm773 = vcmask 1043456
        %v775 = vsel %vm773, %v761, 0
        %777 = vmatprep.subr.bf16.mxu0 0
        %778 = vmatpush1.bf16.msra.mxu0 %v775
        %779 = vmatprep.subr.bf16.mxu0 0
        %780 = vmatpush1.bf16.msra.mxu0 0
        %781 = vmatprep.subr.bf16.mxu0 0
        %782 = vmatpush1.bf16.msra.mxu0 0
        %783 = vmatprep.subr.bf16.mxu0 0
        %784 = vmatpush1.bf16.msra.mxu0 0
        %785 = vmatprep.subr.bf16.mxu0 0
        %786 = vmatpush1.bf16.msra.mxu0 0
        %787 = vmatprep.subr.bf16.mxu0 0
        %788 = vmatpush1.bf16.msra.mxu0 0
        %789 = vmatprep.subr.bf16.mxu0 0
        %790 = vmatpush1.bf16.msra.mxu0 0
        %791 = vmatprep.subr.bf16.mxu0 0
        %792 = vmatpush1.bf16.msra.mxu0 0
        %793 = vmatprep.subr.bf16.mxu0 0
        %794 = vmatpush1.bf16.msra.mxu0 0
        %795 = vmatprep.subr.bf16.mxu0 0
        %796 = vmatpush1.bf16.msra.mxu0 0
        %797 = vmatprep.subr.bf16.mxu0 0
        %798 = vmatpush1.bf16.msra.mxu0 0
        %799 = vmatprep.subr.bf16.mxu0 0
        %800 = vmatpush1.bf16.msra.mxu0 0
        %801 = vmatprep.subr.bf16.mxu0 0
        %802 = vmatpush1.bf16.msra.mxu0 0
        %803 = vmatprep.subr.bf16.mxu0 0
        %804 = vmatpush1.bf16.msra.mxu0 0
        %805 = vmatprep.subr.bf16.mxu0 0
        %806 = vmatpush1.bf16.msra.mxu0 0
        %807 = vmatprep.subr.bf16.mxu0 0
        %808 = vmatpush1.bf16.msra.mxu0 0
        %809 = vmatprep.mubr.bf16.mxu0 0
        %810 = vmatmul.mubr.bf16.gmra.mrb[0].mxu0 %v771
        %v811 = vpop.f32.mrb[0].mxu0
        %v812 = vadd.f32 %v767, %v811
        %v813 = vpop.f32.mrb[0].mxu0
        %v814 = vpop.f32.mrb[0].mxu0
        %v815 = vpop.f32.mrb[0].mxu0
        %816 = vdwg.mxu0
        %v817 = vmax.f32 %v812, 0.0
        %v818 = vpack.c.bf16 %v817, %v817
        %v820 = vsel %vm773, %v818, 0
        %822 = vmatprep.subr.bf16.mxu0 0
        %823 = vmatpush1.bf16.msra.mxu0 %v820
        %824 = vmatprep.subr.bf16.mxu0 0
        %825 = vmatpush1.bf16.msra.mxu0 0
        %826 = vmatprep.subr.bf16.mxu0 0
        %827 = vmatpush1.bf16.msra.mxu0 0
        %828 = vmatprep.subr.bf16.mxu0 0
        %829 = vmatpush1.bf16.msra.mxu0 0
        %830 = vmatprep.subr.bf16.mxu0 0
        %831 = vmatpush1.bf16.msra.mxu0 0
        %832 = vmatprep.subr.bf16.mxu0 0
        %833 = vmatpush1.bf16.msra.mxu0 0
        %834 = vmatprep.subr.bf16.mxu0 0
        %835 = vmatpush1.bf16.msra.mxu0 0
        %836 = vmatprep.subr.bf16.mxu0 0
        %837 = vmatpush1.bf16.msra.mxu0 0
        %838 = vmatprep.subr.bf16.mxu0 0
        %839 = vmatpush1.bf16.msra.mxu0 0
        %840 = vmatprep.subr.bf16.mxu0 0
        %841 = vmatpush1.bf16.msra.mxu0 0
        %842 = vmatprep.subr.bf16.mxu0 0
        %843 = vmatpush1.bf16.msra.mxu0 0
        %844 = vmatprep.subr.bf16.mxu0 0
        %845 = vmatpush1.bf16.msra.mxu0 0
        %846 = vmatprep.subr.bf16.mxu0 0
        %847 = vmatpush1.bf16.msra.mxu0 0
        %848 = vmatprep.subr.bf16.mxu0 0
        %849 = vmatpush1.bf16.msra.mxu0 0
        %850 = vmatprep.subr.bf16.mxu0 0
        %851 = vmatpush1.bf16.msra.mxu0 0
        %852 = vmatprep.subr.bf16.mxu0 0
        %853 = vmatpush1.bf16.msra.mxu0 0
        %854 = vmatprep.mubr.bf16.mxu0 0
        %855 = vmatmul.mubr.bf16.gmra.mrb[0].mxu0 %v771
        %v856 = vpop.f32.mrb[0].mxu0
        %v857 = vadd.f32 0.0, %v856
        %v858 = vpop.f32.mrb[0].mxu0
        %v859 = vpop.f32.mrb[0].mxu0
        %v860 = vpop.f32.mrb[0].mxu0
        %861 = vdwg.mxu0
        %v862 = vpack.c.bf16 %v857, %v857
        %v863 = vld [vmem:[%s4] sm:$0xf]
        %v864 = vld [vmem:[%s4 + $0x4] sm:$0xf]
        %v865 = vld [vmem:[#allocation8] sm:$0x1]
        %v867 = vlaneseq
        %v868 = vshrl.u32 %v867, 7
        %v869 = vsub.s32 0, %v868
        %v870 = vrot.slane %v865, %v869
        %v874 = vunpack.c.l.b16 %v863
        %v875 = vunpack.c.l.b16 %v864
        %v876 = vpack.c.b16 %v875, %v874
        %v879 = vsel %vm717, %v862, 0
        %881 = vmatprep.subr.bf16.mxu0 0
        %882 = vmatpush1.bf16.msra.mxu0 %v876
        %883 = vmatprep.subr.bf16.mxu0 0
        %884 = vmatpush1.bf16.msra.mxu0 0
        %885 = vmatprep.subr.bf16.mxu0 0
        %886 = vmatpush1.bf16.msra.mxu0 0
        %887 = vmatprep.subr.bf16.mxu0 0
        %888 = vmatpush1.bf16.msra.mxu0 0
        %889 = vmatprep.subr.bf16.mxu0 0
        %890 = vmatpush1.bf16.msra.mxu0 0
        %891 = vmatprep.subr.bf16.mxu0 0
        %892 = vmatpush1.bf16.msra.mxu0 0
        %893 = vmatprep.subr.bf16.mxu0 0
        %894 = vmatpush1.bf16.msra.mxu0 0
        %895 = vmatprep.subr.bf16.mxu0 0
        %896 = vmatpush1.bf16.msra.mxu0 0
        %897 = vmatprep.subr.bf16.mxu0 0
        %898 = vmatpush1.bf16.msra.mxu0 0
        %899 = vmatprep.subr.bf16.mxu0 0
        %900 = vmatpush1.bf16.msra.mxu0 0
        %901 = vmatprep.subr.bf16.mxu0 0
        %902 = vmatpush1.bf16.msra.mxu0 0
        %903 = vmatprep.subr.bf16.mxu0 0
        %904 = vmatpush1.bf16.msra.mxu0 0
        %905 = vmatprep.subr.bf16.mxu0 0
        %906 = vmatpush1.bf16.msra.mxu0 0
        %907 = vmatprep.subr.bf16.mxu0 0
        %908 = vmatpush1.bf16.msra.mxu0 0
        %909 = vmatprep.subr.bf16.mxu0 0
        %910 = vmatpush1.bf16.msra.mxu0 0
        %911 = vmatprep.subr.bf16.mxu0 0
        %912 = vmatpush1.bf16.msra.mxu0 0
        %913 = vmatprep.mubr.bf16.mxu0 0
        %914 = vmatmul.mubr.bf16.gmra.mrb[0].mxu0 %v879
        %v915 = vpop.f32.mrb[0].mxu0
        %v916 = vadd.f32 %v870, %v915
        %v917 = vpop.f32.mrb[0].mxu0
        %v918 = vpop.f32.mrb[0].mxu0
        %v919 = vpop.f32.mrb[0].mxu0
        %920 = vdwg.mxu0
        %v921 = vmax.f32 %v916, 0.0
        %v922 = vpack.c.bf16 %v921, %v921
        %v923 = vsel %vm717, %v817, 0.0
        %v924 = vrot.slane %v923, 4
        %v925 = vadd.f32 %v923, %v924
        %v926 = vrot.slane %v925, 2
        %v927 = vadd.f32 %v925, %v926
        %v928 = vrot.slane %v927, 1
        %v929 = vadd.f32 %v927, %v928
        %v930 = vmul.f32 %v929, 0.125
        %v931 = vpack.c.bf16 %v930, %v930
        %v932 = vsel %vm717, %v921, 0.0
        %v933 = vrot.slane %v932, 4
        %v934 = vadd.f32 %v932, %v933
        %v935 = vrot.slane %v934, 2
        %v936 = vadd.f32 %v934, %v935
        %v937 = vrot.slane %v936, 1
        %v938 = vadd.f32 %v936, %v937
        %v939 = vmul.f32 %v938, 0.125
        %v940 = vpack.c.bf16 %v939, %v939
        %v941 = vld [vmem:[#allocation10] sm:$0xf]
        %v942 = vld [vmem:[#allocation10 + $0x4] sm:$0xf]
        %v943 = vld [vmem:[#allocation11] sm:$0xf]
        %v944 = vld [vmem:[#allocation11 + $0x4] sm:$0xf]
        %v947 = vunpack.c.l.b16 %v943
        %v948 = vunpack.c.l.b16 %v944
        %v949 = vpack.c.b16 %v948, %v947
        %v952 = vsel %vm717, %v940, 0
        %954 = vmatprep.subr.bf16.mxu0 0
        %955 = vmatpush1.bf16.msra.mxu0 %v949
        %956 = vmatprep.subr.bf16.mxu0 0
        %957 = vmatpush1.bf16.msra.mxu0 0
        %958 = vmatprep.subr.bf16.mxu0 0
        %959 = vmatpush1.bf16.msra.mxu0 0
        %960 = vmatprep.subr.bf16.mxu0 0
        %961 = vmatpush1.bf16.msra.mxu0 0
        %962 = vmatprep.subr.bf16.mxu0 0
        %963 = vmatpush1.bf16.msra.mxu0 0
        %964 = vmatprep.subr.bf16.mxu0 0
        %965 = vmatpush1.bf16.msra.mxu0 0
        %966 = vmatprep.subr.bf16.mxu0 0
        %967 = vmatpush1.bf16.msra.mxu0 0
        %968 = vmatprep.subr.bf16.mxu0 0
        %969 = vmatpush1.bf16.msra.mxu0 0
        %970 = vmatprep.subr.bf16.mxu0 0
        %971 = vmatpush1.bf16.msra.mxu0 0
        %972 = vmatprep.subr.bf16.mxu0 0
        %973 = vmatpush1.bf16.msra.mxu0 0
        %974 = vmatprep.subr.bf16.mxu0 0
        %975 = vmatpush1.bf16.msra.mxu0 0
        %976 = vmatprep.subr.bf16.mxu0 0
        %977 = vmatpush1.bf16.msra.mxu0 0
        %978 = vmatprep.subr.bf16.mxu0 0
        %979 = vmatpush1.bf16.msra.mxu0 0
        %980 = vmatprep.subr.bf16.mxu0 0
        %981 = vmatpush1.bf16.msra.mxu0 0
        %982 = vmatprep.subr.bf16.mxu0 0
        %983 = vmatpush1.bf16.msra.mxu0 0
        %984 = vmatprep.subr.bf16.mxu0 0
        %985 = vmatpush1.bf16.msra.mxu0 0
        %986 = vmatprep.mubr.bf16.mxu0 0
        %987 = vmatmul.mubr.bf16.gmra.mrb[0].mxu0 %v952
        %v988 = vpop.f32.mrb[0].mxu0
        %v989 = vadd.f32 0.0, %v988
        %v990 = vpop.f32.mrb[0].mxu0
        %v991 = vpop.f32.mrb[0].mxu0
        %v992 = vpop.f32.mrb[0].mxu0
        %993 = vdwg.mxu0
        %v996 = vunpack.c.l.b16 %v941
        %v997 = vunpack.c.l.b16 %v942
        %v998 = vpack.c.b16 %v997, %v996
        %v1001 = vsel %vm717, %v931, 0
        %1003 = vmatprep.subr.bf16.mxu0 0
        %1004 = vmatpush1.bf16.msra.mxu0 %v998
        %1005 = vmatprep.subr.bf16.mxu0 0
        %1006 = vmatpush1.bf16.msra.mxu0 0
        %1007 = vmatprep.subr.bf16.mxu0 0
        %1008 = vmatpush1.bf16.msra.mxu0 0
        %1009 = vmatprep.subr.bf16.mxu0 0
        %1010 = vmatpush1.bf16.msra.mxu0 0
        %1011 = vmatprep.subr.bf16.mxu0 0
        %1012 = vmatpush1.bf16.msra.mxu0 0
        %1013 = vmatprep.subr.bf16.mxu0 0
        %1014 = vmatpush1.bf16.msra.mxu0 0
        %1015 = vmatprep.subr.bf16.mxu0 0
        %1016 = vmatpush1.bf16.msra.mxu0 0
        %1017 = vmatprep.subr.bf16.mxu0 0
        %1018 = vmatpush1.bf16.msra.mxu0 0
        %1019 = vmatprep.subr.bf16.mxu0 0
        %1020 = vmatpush1.bf16.msra.mxu0 0
        %1021 = vmatprep.subr.bf16.mxu0 0
        %1022 = vmatpush1.bf16.msra.mxu0 0
        %1023 = vmatprep.subr.bf16.mxu0 0
        %1024 = vmatpush1.bf16.msra.mxu0 0
        %1025 = vmatprep.subr.bf16.mxu0 0
        %1026 = vmatpush1.bf16.msra.mxu0 0
        %1027 = vmatprep.subr.bf16.mxu0 0
        %1028 = vmatpush1.bf16.msra.mxu0 0
        %1029 = vmatprep.subr.bf16.mxu0 0
        %1030 = vmatpush1.bf16.msra.mxu0 0
        %1031 = vmatprep.subr.bf16.mxu0 0
        %1032 = vmatpush1.bf16.msra.mxu0 0
        %1033 = vmatprep.subr.bf16.mxu0 0
        %1034 = vmatpush1.bf16.msra.mxu0 0
        %1035 = vmatprep.mubr.bf16.mxu0 0
        %1036 = vmatmul.mubr.bf16.gmra.mrb[0].mxu0 %v1001
        %v1037 = vpop.f32.mrb[0].mxu0
        %v1038 = vadd.f32 %v989, %v1037
        %v1039 = vpop.f32.mrb[0].mxu0
        %v1040 = vpop.f32.mrb[0].mxu0
        %v1041 = vpop.f32.mrb[0].mxu0
        %1042 = vdwg.mxu0
        %v1043 = vld [vmem:[#allocation13] sm:$0x1]
        %v1044 = vadd.f32 %v1038, %v1043
        %v1045 = vmax.f32 %v1044, 0.0
        %v1046 = vpack.c.bf16 %v1045, %v1045
        %v1047 = vld [vmem:[%s9] sm:$0xf]
        %v1048 = vld [vmem:[%s9 + $0x4] sm:$0xf]
        %v1049 = vld [vmem:[%s9 + $0x8] sm:$0xf]
        %v1050 = vld [vmem:[%s9 + $0xc] sm:$0xf]
        %v1051 = vld [vmem:[#allocation14] sm:$0x1]
        %v1056 = vunpack.c.l.b16 %v1047
        %v1057 = vunpack.c.l.b16 %v1048
        %v1058 = vunpack.c.l.b16 %v1049
        %v1059 = vunpack.c.l.b16 %v1050
        %v1060 = vpack.c.b16 %v1057, %v1056
        %v1061 = vpack.c.b16 %v1059, %v1058
        %vm1064 = vcmask 261120
        %v1066 = vsel %vm1064, %v1046, 0
        %1068 = vmatprep.subr.bf16.mxu0 0
        %1069 = vmatpush1.bf16.msra.mxu0 %v1060
        %1070 = vmatprep.subr.bf16.mxu0 0
        %1071 = vmatpush1.bf16.msra.mxu0 %v1061
        %1072 = vmatprep.subr.bf16.mxu0 0
        %1073 = vmatpush1.bf16.msra.mxu0 0
        %1074 = vmatprep.subr.bf16.mxu0 0
        %1075 = vmatpush1.bf16.msra.mxu0 0
        %1076 = vmatprep.subr.bf16.mxu0 0
        %1077 = vmatpush1.bf16.msra.mxu0 0
        %1078 = vmatprep.subr.bf16.mxu0 0
        %1079 = vmatpush1.bf16.msra.mxu0 0
        %1080 = vmatprep.subr.bf16.mxu0 0
        %1081 = vmatpush1.bf16.msra.mxu0 0
        %1082 = vmatprep.subr.bf16.mxu0 0
        %1083 = vmatpush1.bf16.msra.mxu0 0
        %1084 = vmatprep.subr.bf16.mxu0 0
        %1085 = vmatpush1.bf16.msra.mxu0 0
        %1086 = vmatprep.subr.bf16.mxu0 0
        %1087 = vmatpush1.bf16.msra.mxu0 0
        %1088 = vmatprep.subr.bf16.mxu0 0
        %1089 = vmatpush1.bf16.msra.mxu0 0
        %1090 = vmatprep.subr.bf16.mxu0 0
        %1091 = vmatpush1.bf16.msra.mxu0 0
        %1092 = vmatprep.subr.bf16.mxu0 0
        %1093 = vmatpush1.bf16.msra.mxu0 0
        %1094 = vmatprep.subr.bf16.mxu0 0
        %1095 = vmatpush1.bf16.msra.mxu0 0
        %1096 = vmatprep.subr.bf16.mxu0 0
        %1097 = vmatpush1.bf16.msra.mxu0 0
        %1098 = vmatprep.subr.bf16.mxu0 0
        %1099 = vmatpush1.bf16.msra.mxu0 0
        %1100 = vmatprep.mubr.bf16.mxu0 0
        %1101 = vmatmul.mubr.bf16.gmra.mrb[0].mxu0 %v1066
        %v1102 = vpop.f32.mrb[0].mxu0
        %v1103 = vadd.f32 %v1051, %v1102
        %v1104 = vpop.f32.mrb[0].mxu0
        %v1105 = vpop.f32.mrb[0].mxu0
        %v1106 = vpop.f32.mrb[0].mxu0
        %1107 = vdwg.mxu0
        %1108 = vst [vmem:[%s698] sm:$0x1] %v1103
        %v1109 = vld [vmem:[%s11] sm:$0xf]
        %v1110 = vld [vmem:[%s11 + $0x4] sm:$0xf]
        %v1111 = vld [vmem:[%s12] sm:$0xf]
        %v1112 = vld [vmem:[%s12 + $0x4] sm:$0xf]
        %v1115 = vunpack.c.l.b16 %v1111
        %v1116 = vunpack.c.l.b16 %v1112
        %v1117 = vpack.c.b16 %v1116, %v1115
        %v1120 = vsel %vm717, %v922, 0
        %1122 = vmatprep.subr.bf16.mxu0 0
        %1123 = vmatpush1.bf16.msra.mxu0 %v1117
        %1124 = vmatprep.subr.bf16.mxu0 0
        %1125 = vmatpush1.bf16.msra.mxu0 0
        %1126 = vmatprep.subr.bf16.mxu0 0
        %1127 = vmatpush1.bf16.msra.mxu0 0
        %1128 = vmatprep.subr.bf16.mxu0 0
        %1129 = vmatpush1.bf16.msra.mxu0 0
        %1130 = vmatprep.subr.bf16.mxu0 0
        %1131 = vmatpush1.bf16.msra.mxu0 0
        %1132 = vmatprep.subr.bf16.mxu0 0
        %1133 = vmatpush1.bf16.msra.mxu0 0
        %1134 = vmatprep.subr.bf16.mxu0 0
        %1135 = vmatpush1.bf16.msra.mxu0 0
        %1136 = vmatprep.subr.bf16.mxu0 0
        %1137 = vmatpush1.bf16.msra.mxu0 0
        %1138 = vmatprep.subr.bf16.mxu0 0
        %1139 = vmatpush1.bf16.msra.mxu0 0
        %1140 = vmatprep.subr.bf16.mxu0 0
        %1141 = vmatpush1.bf16.msra.mxu0 0
        %1142 = vmatprep.subr.bf16.mxu0 0
        %1143 = vmatpush1.bf16.msra.mxu0 0
        %1144 = vmatprep.subr.bf16.mxu0 0
        %1145 = vmatpush1.bf16.msra.mxu0 0
        %1146 = vmatprep.subr.bf16.mxu0 0
        %1147 = vmatpush1.bf16.msra.mxu0 0
        %1148 = vmatprep.subr.bf16.mxu0 0
        %1149 = vmatpush1.bf16.msra.mxu0 0
        %1150 = vmatprep.subr.bf16.mxu0 0
        %1151 = vmatpush1.bf16.msra.mxu0 0
        %1152 = vmatprep.subr.bf16.mxu0 0
        %1153 = vmatpush1.bf16.msra.mxu0 0
        %1154 = vmatprep.mubr.bf16.mxu0 0
        %1155 = vmatmul.mubr.bf16.gmra.mrb[0].mxu0 %v1120
        %v1156 = vpop.f32.mrb[0].mxu0
        %v1157 = vadd.f32 0.0, %v1156
        %v1158 = vpop.f32.mrb[0].mxu0
        %v1159 = vpop.f32.mrb[0].mxu0
        %v1160 = vpop.f32.mrb[0].mxu0
        %1161 = vdwg.mxu0
        %v1164 = vunpack.c.l.b16 %v1109
        %v1165 = vunpack.c.l.b16 %v1110
        %v1166 = vpack.c.b16 %v1165, %v1164
        %v1168 = vsel %vm717, %v818, 0
        %1170 = vmatprep.subr.bf16.mxu0 0
        %1171 = vmatpush1.bf16.msra.mxu0 %v1166
        %1172 = vmatprep.subr.bf16.mxu0 0
        %1173 = vmatpush1.bf16.msra.mxu0 0
        %1174 = vmatprep.subr.bf16.mxu0 0
        %1175 = vmatpush1.bf16.msra.mxu0 0
        %1176 = vmatprep.subr.bf16.mxu0 0
        %1177 = vmatpush1.bf16.msra.mxu0 0
        %1178 = vmatprep.subr.bf16.mxu0 0
        %1179 = vmatpush1.bf16.msra.mxu0 0
        %1180 = vmatprep.subr.bf16.mxu0 0
        %1181 = vmatpush1.bf16.msra.mxu0 0
        %1182 = vmatprep.subr.bf16.mxu0 0
        %1183 = vmatpush1.bf16.msra.mxu0 0
        %1184 = vmatprep.subr.bf16.mxu0 0
        %1185 = vmatpush1.bf16.msra.mxu0 0
        %1186 = vmatprep.subr.bf16.mxu0 0
        %1187 = vmatpush1.bf16.msra.mxu0 0
        %1188 = vmatprep.subr.bf16.mxu0 0
        %1189 = vmatpush1.bf16.msra.mxu0 0
        %1190 = vmatprep.subr.bf16.mxu0 0
        %1191 = vmatpush1.bf16.msra.mxu0 0
        %1192 = vmatprep.subr.bf16.mxu0 0
        %1193 = vmatpush1.bf16.msra.mxu0 0
        %1194 = vmatprep.subr.bf16.mxu0 0
        %1195 = vmatpush1.bf16.msra.mxu0 0
        %1196 = vmatprep.subr.bf16.mxu0 0
        %1197 = vmatpush1.bf16.msra.mxu0 0
        %1198 = vmatprep.subr.bf16.mxu0 0
        %1199 = vmatpush1.bf16.msra.mxu0 0
        %1200 = vmatprep.subr.bf16.mxu0 0
        %1201 = vmatpush1.bf16.msra.mxu0 0
        %1202 = vmatprep.mubr.bf16.mxu0 0
        %1203 = vmatmul.mubr.bf16.gmra.mrb[0].mxu0 %v1168
        %v1204 = vpop.f32.mrb[0].mxu0
        %v1205 = vadd.f32 %v1157, %v1204
        %v1206 = vpop.f32.mrb[0].mxu0
        %v1207 = vpop.f32.mrb[0].mxu0
        %v1208 = vpop.f32.mrb[0].mxu0
        %1209 = vdwg.mxu0
        %v1210 = vld [vmem:[%s13] sm:$0x1]
        %v1212 = vlaneseq
        %v1213 = vshrl.u32 %v1212, 7
        %v1214 = vsub.s32 0, %v1213
        %v1215 = vrot.slane %v1210, %v1214
        %v1217 = vadd.f32 %v1205, %v1215
        %v1218 = vmax.f32 %v1217, 0.0
        %v1219 = vpack.c.bf16 %v1218, %v1218
        %v1220 = vld [vmem:[#allocation16] sm:$0xf]
        %v1221 = vld [vmem:[#allocation16 + $0x4] sm:$0xf]
        %v1222 = vld [vmem:[#allocation16 + $0x8] sm:$0xf]
        %v1223 = vld [vmem:[#allocation16 + $0xc] sm:$0xf]
        %v1224 = vld [vmem:[#allocation16 + $0x10] sm:$0xf]
        %v1225 = vld [vmem:[#allocation16 + $0x14] sm:$0xf]
        %v1226 = vld [vmem:[#allocation16 + $0x18] sm:$0xf]
        %v1227 = vld [vmem:[#allocation16 + $0x1c] sm:$0xf]
        %v1228 = vld [vmem:[#allocation16 + $0x20] sm:$0xf]
        %v1229 = vld [vmem:[#allocation16 + $0x24] sm:$0xf]
        %v1230 = vld [vmem:[#allocation16 + $0x28] sm:$0xf]
        %v1231 = vld [vmem:[#allocation16 + $0x2c] sm:$0xf]
        %v1232 = vld [vmem:[#allocation16 + $0x30] sm:$0xf]
        %v1233 = vld [vmem:[#allocation16 + $0x34] sm:$0xf]
        %v1234 = vld [vmem:[#allocation16 + $0x38] sm:$0xf]
        %v1235 = vld [vmem:[#allocation16 + $0x3c] sm:$0xf]
        %v1236 = vld [vmem:[%s15] sm:$0x1]
        %v1238 = vlaneseq
        %v1239 = vshrl.u32 %v1238, 7
        %v1240 = vsub.s32 0, %v1239
        %v1241 = vrot.slane %v1236, %v1240
        %v1259 = vunpack.c.l.b16 %v1220
        %v1260 = vunpack.c.l.b16 %v1221
        %v1261 = vunpack.c.l.b16 %v1222
        %v1262 = vunpack.c.l.b16 %v1223
        %v1263 = vunpack.c.l.b16 %v1224
        %v1264 = vunpack.c.l.b16 %v1225
        %v1265 = vunpack.c.l.b16 %v1226
        %v1266 = vunpack.c.l.b16 %v1227
        %v1267 = vunpack.c.l.b16 %v1228
        %v1268 = vunpack.c.l.b16 %v1229
        %v1269 = vunpack.c.l.b16 %v1230
        %v1270 = vunpack.c.l.b16 %v1231
        %v1271 = vunpack.c.l.b16 %v1232
        %v1272 = vunpack.c.l.b16 %v1233
        %v1273 = vunpack.c.l.b16 %v1234
        %v1274 = vunpack.c.l.b16 %v1235
        %v1275 = vpack.c.b16 %v1260, %v1259
        %v1276 = vpack.c.b16 %v1262, %v1261
        %v1277 = vpack.c.b16 %v1264, %v1263
        %v1278 = vpack.c.b16 %v1266, %v1265
        %v1279 = vpack.c.b16 %v1268, %v1267
        %v1280 = vpack.c.b16 %v1270, %v1269
        %v1281 = vpack.c.b16 %v1272, %v1271
        %v1282 = vpack.c.b16 %v1274, %v1273
        %1291 = vmatprep.subr.bf16.mxu0 0
        %1292 = vmatpush1.bf16.msra.mxu0 %v1275
        %1293 = vmatprep.subr.bf16.mxu0 0
        %1294 = vmatpush1.bf16.msra.mxu0 %v1276
        %1295 = vmatprep.subr.bf16.mxu0 0
        %1296 = vmatpush1.bf16.msra.mxu0 %v1277
        %1297 = vmatprep.subr.bf16.mxu0 0
        %1298 = vmatpush1.bf16.msra.mxu0 %v1278
        %1299 = vmatprep.subr.bf16.mxu0 0
        %1300 = vmatpush1.bf16.msra.mxu0 %v1279
        %1301 = vmatprep.subr.bf16.mxu0 0
        %1302 = vmatpush1.bf16.msra.mxu0 %v1280
        %1303 = vmatprep.subr.bf16.mxu0 0
        %1304 = vmatpush1.bf16.msra.mxu0 %v1281
        %1305 = vmatprep.subr.bf16.mxu0 0
        %1306 = vmatpush1.bf16.msra.mxu0 %v1282
        %1307 = vmatprep.subr.bf16.mxu0 0
        %1308 = vmatpush1.bf16.msra.mxu0 0
        %1309 = vmatprep.subr.bf16.mxu0 0
        %1310 = vmatpush1.bf16.msra.mxu0 0
        %1311 = vmatprep.subr.bf16.mxu0 0
        %1312 = vmatpush1.bf16.msra.mxu0 0
        %1313 = vmatprep.subr.bf16.mxu0 0
        %1314 = vmatpush1.bf16.msra.mxu0 0
        %1315 = vmatprep.subr.bf16.mxu0 0
        %1316 = vmatpush1.bf16.msra.mxu0 0
        %1317 = vmatprep.subr.bf16.mxu0 0
        %1318 = vmatpush1.bf16.msra.mxu0 0
        %1319 = vmatprep.subr.bf16.mxu0 0
        %1320 = vmatpush1.bf16.msra.mxu0 0
        %1321 = vmatprep.subr.bf16.mxu0 0
        %1322 = vmatpush1.bf16.msra.mxu0 0
        %1323 = vmatprep.mubr.bf16.mxu0 0
        %1324 = vmatmul.mubr.bf16.gmra.mrb[0].mxu0 %v1219
        %v1325 = vpop.f32.mrb[0].mxu0
        %v1326 = vadd.f32 %v1241, %v1325
        %v1327 = vpop.f32.mrb[0].mxu0
        %v1328 = vpop.f32.mrb[0].mxu0
        %v1329 = vpop.f32.mrb[0].mxu0
        %1330 = vdwg.mxu0
        %v1331 = vpack.c.bf16 %v1326, %v1326
        %1332 = vst [vmem:[%s705] sm:$0xf] %v1331
        %s1333 = sand.u32 %s398, 1
        %s1334 = scalar_lea.sflag [#allocation4], %s1333
        %s1335 = sand.u32 %s398, 1
        %s1336 = scalar_lea.vmem [#allocation17], %s1335
        %s1337 = sand.u32 %s424, 1
        %s1338 = scalar_lea.sflag [#allocation19], %s1337
        %s1339 = sand.u32 %s424, 1
        %s1340 = smul.addr %s1339, 4
        %s1341 = scalar_lea.vmem [#allocation18], %s1340
        // Predicated region
        $region121: #{tpu_custom_call.1} parent=83 // pred_check
          %p1342 = pneg %p408
        $region122: #{tpu_custom_call.1} parent=83 // pred_check_branch
          %1344 = sbr.rel (%p1342) target = $region124
        $region123: #{tpu_custom_call.1} parent=83 // pred_region
          %s1346 = ssub.s32 16, 16
          %1347 = vsyncadd %s1334, %s1346
          %s1348 = smul.addr %s44, 16
          %s1349 = scalar_lea.hbm %s16, %s1348
          %s1351 = sshll.u32 %s1336, 4
          %s1352 = int_to_ptr.vmem [resolvable:$true] %s1351
          %1354 = dma.vmem_to_hbm [thread:$0]  %s1352, 16, %s1349, %s1334
        $region124: #{tpu_custom_call.1} parent=83 // pred_fallthru
          _
        // Predicated region
        $region125: #{tpu_custom_call.1} parent=83 // pred_check
          %p1355 = pneg %p434
        $region126: #{tpu_custom_call.1} parent=83 // pred_check_branch
          %1357 = sbr.rel (%p1355) target = $region128
        $region127: #{tpu_custom_call.1} parent=83 // pred_region
          %s1359 = ssub.s32 64, 64
          %1360 = vsyncadd %s1338, %s1359
          %s1361 = smul.addr %s44, 64
          %s1362 = scalar_lea.hbm %s17, %s1361
          %s1364 = sshll.u32 %s1341, 4
          %s1365 = int_to_ptr.vmem [resolvable:$true] %s1364
          %1367 = dma.vmem_to_hbm [thread:$0]  %s1365, 64, %s1362, %s1338
        $region128: #{tpu_custom_call.1} parent=83 // pred_fallthru
          _
      $region84: #{tpu_custom_call.1} parent=5 // pred_fallthru
        _
      %p1368 = scmp.le.s32.totalorder 2, %s39
      // Predicated region
      $region129: #{tpu_custom_call.1} parent=5 // pred_check
        %p1369 = pneg %p1368
      $region130: #{tpu_custom_call.1} parent=5 // pred_check_branch
        %1371 = sbr.rel (%p1369) target = $region132
      $region131: #{tpu_custom_call.1} parent=5 // pred_region
        %s1372 = ssub.s32 %s39, 2
        // Predicated region
        $region133: #{tpu_custom_call.1} parent=131 // pred_check
          %p1373 = pneg %p414
        $region134: #{tpu_custom_call.1} parent=131 // pred_check_branch
          %1375 = sbr.rel (%p1373) target = $region136
        $region135: #{tpu_custom_call.1} parent=131 // pred_region
          %s1376 = sand.u32 %s399, 1
          %s1377 = scalar_lea.sflag [#allocation4], %s1376
          %s1378 = sand.u32 %s399, 1
          %s1379 = scalar_lea.vmem [#allocation17], %s1378
          %1380 = dma.done %s1377, 16
        $region136: #{tpu_custom_call.1} parent=131 // pred_fallthru
          _
        // Predicated region
        $region137: #{tpu_custom_call.1} parent=131 // pred_check
          %p1381 = pneg %p440
        $region138: #{tpu_custom_call.1} parent=131 // pred_check_branch
          %1383 = sbr.rel (%p1381) target = $region140
        $region139: #{tpu_custom_call.1} parent=131 // pred_region
          %s1384 = sand.u32 %s425, 1
          %s1385 = scalar_lea.sflag [#allocation19], %s1384
          %s1386 = sand.u32 %s425, 1
          %s1387 = smul.addr %s1386, 4
          %s1388 = scalar_lea.vmem [#allocation18], %s1387
          %1389 = dma.done %s1385, 64
        $region140: #{tpu_custom_call.1} parent=131 // pred_fallthru
          _
      $region132: #{tpu_custom_call.1} parent=5 // pred_fallthru
        _
    $region6: #{tpu_custom_call.1} parent=1 // loop_footer
      %s43 = sadd.s32 1, %s39
    $region7: #{tpu_custom_call.1} parent=1 // loop_footer_branch
      %38 = sbr.rel target = $region3
    $region8: #{tpu_custom_call.1} parent=1 // loop_exit
      _
    %1390 = vsyncpa [#allocation3], 1
    %s1391 = scalar_lea.sflag [#allocation3], 1
    %1392 = vsyncpa %s1391, 1
    %1393 = vsyncpa [#allocation6], 1
    %s1394 = scalar_lea.sflag [#allocation6], 1
    %1395 = vsyncpa %s1394, 1
    %1396 = vsyncpa [#allocation9], 1
    %1397 = vsyncpa [#allocation12], 1
    %1398 = vsyncpa [#allocation15], 1
    %1399 = vsyncpa [#allocation4], 1
    %s1400 = scalar_lea.sflag [#allocation4], 1
    %1401 = vsyncpa %s1400, 1
    %1402 = vsyncpa [#allocation19], 1
    %s1403 = scalar_lea.sflag [#allocation19], 1
    %1404 = vsyncpa %s1403, 1

</llo_original>
